<compile_context>
chip_gen: v7x
topology: tpu7x:2x2x1
jax: 0.10.0
libtpu: 0.0.40
codegen_flags: <defaults>
</compile_context>

<pallas_src>
import functools

import jax
import jax.numpy as jnp
from jax import lax
from jax.experimental import pallas as pl
from jax.experimental.pallas import tpu as pltpu


# ----------------------------- shared kernel pieces -------------------------

def _project_inputs(x_ref, wih_ref, b_ref, gx_scr):
    """Batched input projection for the whole time chunk (one MXU matmul)."""
    Tt, Bt, D = x_ref.shape
    G = gx_scr.shape[-1]
    x2 = x_ref[...].reshape(Tt * Bt, D)                       # (Tt*B, D)
    gx = jnp.dot(x2, wih_ref[...],
                 preferred_element_type=jnp.float32) + b_ref[...]
    gx_scr[...] = gx.reshape(Tt, Bt, G)                       # (Tt, B, 4H)


def _chunk_recurrence(whh_ref, h_scr, c_scr, gx_scr, store_fn):
    """Serial LSTM recurrence over one time chunk. Gate order i|f|g|o."""
    H = h_scr.shape[-1]
    Tt = gx_scr.shape[0]

    whh = whh_ref[...]                                        # hoisted load

    # Column constants so ONE full-width tanh implements sigmoid on i|f|o and
    # tanh on g:  sigmoid(x) = 0.5 * tanh(0.5 * x) + 0.5.
    col = lax.broadcasted_iota(jnp.int32, (1, 4 * H), 1)
    is_g = (col >= 2 * H) & (col < 3 * H)
    pre = jnp.where(is_g, 1.0, 0.5).astype(jnp.float32)       # scale (in & out)
    post = jnp.where(is_g, 0.0, 0.5).astype(jnp.float32)      # shift (out)

    def step(t, carry):
        h = h_scr[...]
        c = c_scr[...]
        gates = gx_scr[t] + jnp.dot(h, whh,
                                    preferred_element_type=jnp.float32)
        act = jnp.tanh(gates * pre) * pre + post               # (B, 4H), 1 EUP
        i_g = act[:, 0 * H:1 * H]
        f_g = act[:, 1 * H:2 * H]
        g_g = act[:, 2 * H:3 * H]
        o_g = act[:, 3 * H:4 * H]
        c_new = f_g * c + i_g * g_g
        h_new = o_g * jnp.tanh(c_new)                          # 2nd EUP push
        h_scr[...] = h_new
        c_scr[...] = c_new
        store_fn(t, h_new)
        return carry

    lax.fori_loop(0, Tt, step, 0, unroll=True if Tt <= 16 else 8)


# ----------------------------- Pallas kernels -------------------------------

def _lstm_seq_kernel(x_ref, wih_ref, whh_ref, b_ref, out_ref,
                     h_scr, c_scr, gx_scr):
    """Non-final LSTM layer: emits the hidden state for every timestep."""
    @pl.when(pl.program_id(1) == 0)
    def _():
        h_scr[...] = jnp.zeros_like(h_scr)
        c_scr[...] = jnp.zeros_like(c_scr)

    _project_inputs(x_ref, wih_ref, b_ref, gx_scr)

    def store(t, h_new):
        out_ref[t] = h_new.astype(out_ref.dtype)

    _chunk_recurrence(whh_ref, h_scr, c_scr, gx_scr, store)


def _lstm_last_fc_kernel(x_ref, wih_ref, whh_ref, b_ref, fcw_ref, fcb_ref,
                         o_ref, h_scr, c_scr, gx_scr):
    """Final LSTM layer fused with the FC head: only (B, O) is written."""
    @pl.when(pl.program_id(1) == 0)
    def _():
        h_scr[...] = jnp.zeros_like(h_scr)
        c_scr[...] = jnp.zeros_like(c_scr)

    _project_inputs(x_ref, wih_ref, b_ref, gx_scr)

    _chunk_recurrence(whh_ref, h_scr, c_scr, gx_scr, lambda t, h: None)

    @pl.when(pl.program_id(1) == pl.num_programs(1) - 1)
    def _():
        o_ref[...] = (
            jnp.dot(h_scr[...], fcw_ref[...],
                    preferred_element_type=jnp.float32) + fcb_ref[...]
        ).astype(o_ref.dtype)


# ----------------------------- wrappers --------------------------------------

def _lstm_seq_layer(x_tbd, w_ih_t, w_hh_t, b, *, t_chunk, b_chunk):
    T, B, D = x_tbd.shape
    H = w_hh_t.shape[0]
    G = 4 * H
    grid = (B // b_chunk, T // t_chunk)
    return pl.pallas_call(
        _lstm_seq_kernel,
        out_shape=jax.ShapeDtypeStruct((T, B, H), jnp.float32),
        grid=grid,
        in_specs=[
            pl.BlockSpec((t_chunk, b_chunk, D), lambda i, j: (j, i, 0)),
            pl.BlockSpec((D, G), lambda i, j: (0, 0)),
            pl.BlockSpec((H, G), lambda i, j: (0, 0)),
            pl.BlockSpec((1, G), lambda i, j: (0, 0)),
        ],
        out_specs=pl.BlockSpec((t_chunk, b_chunk, H), lambda i, j: (j, i, 0)),
        scratch_shapes=[
            pltpu.VMEM((b_chunk, H), jnp.float32),           # h carry
            pltpu.VMEM((b_chunk, H), jnp.float32),           # c carry
            pltpu.VMEM((t_chunk, b_chunk, G), jnp.float32),  # precomputed x-gates
        ],
        compiler_params=pltpu.CompilerParams(
            dimension_semantics=("parallel", "arbitrary")),
    )(x_tbd, w_ih_t, w_hh_t, b)


def _lstm_last_fc_layer(x_tbd, w_ih_t, w_hh_t, b, fc_w_t, fc_b,
                        *, t_chunk, b_chunk):
    T, B, D = x_tbd.shape
    H = w_hh_t.shape[0]
    G = 4 * H
    O = fc_w_t.shape[1]
    grid = (B // b_chunk, T // t_chunk)
    return pl.pallas_call(
        _lstm_last_fc_kernel,
        out_shape=jax.ShapeDtypeStruct((B, O), jnp.float32),
        grid=grid,
        in_specs=[
            pl.BlockSpec((t_chunk, b_chunk, D), lambda i, j: (j, i, 0)),
            pl.BlockSpec((D, G), lambda i, j: (0, 0)),
            pl.BlockSpec((H, G), lambda i, j: (0, 0)),
            pl.BlockSpec((1, G), lambda i, j: (0, 0)),
            pl.BlockSpec((H, O), lambda i, j: (0, 0)),
            pl.BlockSpec((1, O), lambda i, j: (0, 0)),
        ],
        out_specs=pl.BlockSpec((b_chunk, O), lambda i, j: (i, 0)),
        scratch_shapes=[
            pltpu.VMEM((b_chunk, H), jnp.float32),
            pltpu.VMEM((b_chunk, H), jnp.float32),
            pltpu.VMEM((t_chunk, b_chunk, G), jnp.float32),
        ],
        compiler_params=pltpu.CompilerParams(
            dimension_semantics=("parallel", "arbitrary")),
    )(x_tbd, w_ih_t, w_hh_t, b, fc_w_t, fc_b)


def _largest_divisor(n, cap):
    for c in range(min(n, cap), 0, -1):
        if n % c == 0:
            return c
    return 1


@functools.partial(jax.jit, static_argnames=("t_chunk", "b_chunk"))
def lstm_speedup_predictor(x, params, t_chunk=None, b_chunk=None):
    """x: (B, T, input_size), batch_first — same as the PyTorch module."""
    B, T, _ = x.shape
    Bp = -(-B // 8) * 8                       # pad batch to sublane multiple
    if Bp != B:
        x = jnp.pad(x, ((0, Bp - B), (0, 0), (0, 0)))
    if b_chunk is None:
        b_chunk = Bp                          # single batch block by default
    if t_chunk is None:
        t_chunk = _largest_divisor(T, 128)
    assert T % t_chunk == 0 and Bp % b_chunk == 0

    h_seq = jnp.transpose(x, (1, 0, 2))       # time-major (T, B, D)
    lstm = params["lstm"]
    for (w_ih_t, w_hh_t, b) in lstm[:-1]:
        h_seq = _lstm_seq_layer(h_seq, w_ih_t, w_hh_t, b,
                                t_chunk=t_chunk, b_chunk=b_chunk)
    w_ih_t, w_hh_t, b = lstm[-1]
    out = _lstm_last_fc_layer(h_seq, w_ih_t, w_hh_t, b,
                              params["fc_w"], params["fc_b"],
                              t_chunk=t_chunk, b_chunk=b_chunk)
    return out[:B]


# ----------------------------- parameter init --------------------------------

def init_params(key, input_size, hidden_size, num_layers, output_size):
    """PyTorch-style uniform(-1/sqrt(H), 1/sqrt(H)) init, deterministic."""
    k = 1.0 / jnp.sqrt(jnp.float32(hidden_size))
    lstm_params = []
    for layer in range(num_layers):
        d_in = input_size if layer == 0 else hidden_size
        key, k1, k2, k3, k4 = jax.random.split(key, 5)
        w_ih = jax.random.uniform(k1, (4 * hidden_size, d_in), jnp.float32, -k, k)
        w_hh = jax.random.uniform(k2, (4 * hidden_size, hidden_size), jnp.float32, -k, k)
        b_ih = jax.random.uniform(k3, (4 * hidden_size,), jnp.float32, -k, k)
        b_hh = jax.random.uniform(k4, (4 * hidden_size,), jnp.float32, -k, k)
        lstm_params.append((w_ih.T, w_hh.T, (b_ih + b_hh).reshape(1, -1)))
    key, k5, k6 = jax.random.split(key, 3)
    fc_w = jax.random.uniform(k5, (output_size, hidden_size), jnp.float32, -k, k)
    fc_b = jax.random.uniform(k6, (output_size,), jnp.float32, -k, k)
    return {"lstm": lstm_params, "fc_w": fc_w.T, "fc_b": fc_b.reshape(1, -1)}


# ----------------------------- pure-JAX reference ----------------------------

def reference_forward(x, params):
    B = x.shape[0]
    h_seq = x
    for (w_ih_t, w_hh_t, b) in params["lstm"]:
        H = w_hh_t.shape[0]
        h = jnp.zeros((B, H), jnp.float32)
        c = jnp.zeros((B, H), jnp.float32)
        outs = []
        for t in range(h_seq.shape[1]):
            gates = h_seq[:, t, :] @ w_ih_t + h @ w_hh_t + b
            i_g = jax.nn.sigmoid(gates[:, 0 * H:1 * H])
            f_g = jax.nn.sigmoid(gates[:, 1 * H:2 * H])
            g_g = jnp.tanh(gates[:, 2 * H:3 * H])
            o_g = jax.nn.sigmoid(gates[:, 3 * H:4 * H])
            c = f_g * c + i_g * g_g
            h = o_g * jnp.tanh(c)
            outs.append(h)
        h_seq = jnp.stack(outs, axis=1)
    return h_seq[:, -1, :] @ params["fc_w"] + params["fc_b"]


# ----------------------------- main -------------------------------------------

if __name__ == "__main__":
    input_size, hidden_size, num_layers, output_size = 4, 32, 2, 1
    batch, seq = 2, 8

    key = jax.random.PRNGKey(0)
    key, pkey, xkey = jax.random.split(key, 3)
    params = init_params(pkey, input_size, hidden_size, num_layers, output_size)
    x = jax.random.normal(xkey, (batch, seq, input_size), jnp.float32)

    # t_chunk=4 -> two time blocks, exercising the h/c carry across grid steps.
    out = lstm_speedup_predictor(x, params, t_chunk=4)
    out = jax.block_until_ready(out)

    ref = reference_forward(x, params)
    assert out.shape == (batch, output_size)
    assert jnp.allclose(out, ref, atol=1e-4, rtol=1e-4), (out, ref)

    print("KERNEL_OK")
</pallas_src>

<mosaic_0001>
module attributes {stable_mosaic.version = 11 : i64} {
  func.func @_lstm_seq_kernel(%arg0: i32, %arg1: i32, %arg2: memref<4x8x4xf32, #tpu.memory_space<vmem>>, %arg3: memref<4x128xf32, #tpu.memory_space<vmem>>, %arg4: memref<32x128xf32, #tpu.memory_space<vmem>>, %arg5: memref<1x128xf32, #tpu.memory_space<vmem>>, %arg6: memref<4x8x32xf32, #tpu.memory_space<vmem>>, %arg7: memref<8x32xf32, #tpu.memory_space<vmem>>, %arg8: memref<8x32xf32, #tpu.memory_space<vmem>>, %arg9: memref<4x8x128xf32, #tpu.memory_space<vmem>>) attributes {dimension_semantics = [#tpu.dimension_semantics<parallel>, #tpu.dimension_semantics<arbitrary>], iteration_bounds = array<i64: 1, 2>, scalar_prefetch = 0 : i64, scratch_operands = 3 : i64, tpu.core_type = #tpu.core_type<tc>, window_params = [{transform_indices = @transform_0, window_bounds = array<i64: 4, 8, 4>}, {pipeline_mode = #tpu.pipeline_mode<synchronous>, transform_indices = @transform_1, window_bounds = array<i64: 4, 128>}, {pipeline_mode = #tpu.pipeline_mode<synchronous>, transform_indices = @transform_2, window_bounds = array<i64: 32, 128>}, {pipeline_mode = #tpu.pipeline_mode<synchronous>, transform_indices = @transform_3, window_bounds = array<i64: 1, 128>}, {transform_indices = @transform_4, window_bounds = array<i64: 4, 8, 32>}]} {
    %c0_i32 = arith.constant 0 : i32
    %0 = arith.cmpi eq, %arg1, %c0_i32 : i32
    %1 = arith.extui %0 : i1 to i32
    %c0_i32_0 = arith.constant 0 : i32
    %2 = arith.cmpi ne, %1, %c0_i32_0 : i32
    scf.if %2 {
      %cst_69 = arith.constant 0.000000e+00 : f32
      %141 = vector.broadcast %cst_69 : f32 to vector<8x32xf32>
      %c0_70 = arith.constant 0 : index
      %c0_71 = arith.constant 0 : index
      %142 = vector.load %arg7[%c0_70, %c0_71] : memref<8x32xf32, #tpu.memory_space<vmem>>, vector<8x32xf32>
      tpu.vector_store %arg7[%c0_70, %c0_71], %141 {strides = array<i32>} : memref<8x32xf32, #tpu.memory_space<vmem>>, vector<8x32xf32>,
      %cst_72 = arith.constant 0.000000e+00 : f32
      %143 = vector.broadcast %cst_72 : f32 to vector<8x32xf32>
      %c0_73 = arith.constant 0 : index
      %c0_74 = arith.constant 0 : index
      %144 = vector.load %arg8[%c0_73, %c0_74] : memref<8x32xf32, #tpu.memory_space<vmem>>, vector<8x32xf32>
      tpu.vector_store %arg8[%c0_73, %c0_74], %143 {strides = array<i32>} : memref<8x32xf32, #tpu.memory_space<vmem>>, vector<8x32xf32>,
    } else {
    }
    %c0 = arith.constant 0 : index
    %c0_1 = arith.constant 0 : index
    %c0_2 = arith.constant 0 : index
    %3 = vector.load %arg2[%c0, %c0_1, %c0_2] : memref<4x8x4xf32, #tpu.memory_space<vmem>>, vector<4x8x4xf32>
    %4 = vector.shape_cast %3 : vector<4x8x4xf32> to vector<32x4xf32>
    %c0_3 = arith.constant 0 : index
    %c0_4 = arith.constant 0 : index
    %5 = vector.load %arg3[%c0_3, %c0_4] : memref<4x128xf32, #tpu.memory_space<vmem>>, vector<4x128xf32>
    %cst = arith.constant dense<0.000000e+00> : vector<32x128xf32>
    %6 = tpu.matmul %4, %5, %cst {dimension_numbers = #tpu.dot_dimension_numbers<[1], [0], [0], [1], [0, 0, 1, 1], [], []>} : vector<32x4xf32>, vector<4x128xf32>, vector<32x128xf32> -> vector<32x128xf32>
    %c0_5 = arith.constant 0 : index
    %c0_6 = arith.constant 0 : index
    %7 = vector.load %arg5[%c0_5, %c0_6] : memref<1x128xf32, #tpu.memory_space<vmem>>, vector<1x128xf32>
    %8 = vector.broadcast %7 : vector<1x128xf32> to vector<32x128xf32>
    %9 = arith.addf %6, %8 : vector<32x128xf32>
    %10 = vector.shape_cast %9 : vector<32x128xf32> to vector<4x8x128xf32>
    %c0_7 = arith.constant 0 : index
    %c0_8 = arith.constant 0 : index
    %c0_9 = arith.constant 0 : index
    %11 = vector.load %arg9[%c0_7, %c0_8, %c0_9] : memref<4x8x128xf32, #tpu.memory_space<vmem>>, vector<4x8x128xf32>
    tpu.vector_store %arg9[%c0_7, %c0_8, %c0_9], %10 {strides = array<i32>} : memref<4x8x128xf32, #tpu.memory_space<vmem>>, vector<4x8x128xf32>,
    %c0_10 = arith.constant 0 : index
    %c0_11 = arith.constant 0 : index
    %12 = vector.load %arg4[%c0_10, %c0_11] : memref<32x128xf32, #tpu.memory_space<vmem>>, vector<32x128xf32>
    %13 = tpu.iota {dimensions = array<i32: 1>} : vector<1x128xi32>
    %c64_i32 = arith.constant 64 : i32
    %14 = vector.broadcast %c64_i32 : i32 to vector<1x128xi32>
    %15 = arith.cmpi sge, %13, %14 : vector<1x128xi32>
    %c96_i32 = arith.constant 96 : i32
    %16 = vector.broadcast %c96_i32 : i32 to vector<1x128xi32>
    %17 = arith.cmpi slt, %13, %16 : vector<1x128xi32>
    %18 = arith.andi %15, %17 : vector<1x128xi1>
    %cst_12 = arith.constant 1.000000e+00 : f32
    %cst_13 = arith.constant 5.000000e-01 : f32
    %19 = vector.broadcast %cst_12 : f32 to vector<1x128xf32>
    %20 = vector.broadcast %cst_13 : f32 to vector<1x128xf32>
    %21 = arith.select %18, %19, %20 : vector<1x128xi1>, vector<1x128xf32>
    %cst_14 = arith.constant 0.000000e+00 : f32
    %cst_15 = arith.constant 5.000000e-01 : f32
    %22 = vector.broadcast %cst_14 : f32 to vector<1x128xf32>
    %23 = vector.broadcast %cst_15 : f32 to vector<1x128xf32>
    %24 = arith.select %18, %22, %23 : vector<1x128xi1>, vector<1x128xf32>
    %c0_i32_16 = arith.constant 0 : i32
    %c0_17 = arith.constant 0 : index
    %c0_18 = arith.constant 0 : index
    %25 = vector.load %arg7[%c0_17, %c0_18] : memref<8x32xf32, #tpu.memory_space<vmem>>, vector<8x32xf32>
    %c0_19 = arith.constant 0 : index
    %c0_20 = arith.constant 0 : index
    %26 = vector.load %arg8[%c0_19, %c0_20] : memref<8x32xf32, #tpu.memory_space<vmem>>, vector<8x32xf32>
    %27 = arith.index_cast %c0_i32_16 : i32 to index
    %c0_21 = arith.constant 0 : index
    %c0_22 = arith.constant 0 : index
    %28 = vector.load %arg9[%27, %c0_21, %c0_22] : memref<4x8x128xf32, #tpu.memory_space<vmem>>, vector<1x8x128xf32>
    %29 = vector.shape_cast %28 : vector<1x8x128xf32> to vector<8x128xf32>
    %cst_23 = arith.constant dense<0.000000e+00> : vector<8x128xf32>
    %30 = tpu.matmul %25, %12, %cst_23 {dimension_numbers = #tpu.dot_dimension_numbers<[1], [0], [0], [1], [0, 0, 1, 1], [], []>} : vector<8x32xf32>, vector<32x128xf32>, vector<8x128xf32> -> vector<8x128xf32>
    %31 = arith.addf %29, %30 : vector<8x128xf32>
    %32 = vector.broadcast %21 : vector<1x128xf32> to vector<8x128xf32>
    %33 = arith.mulf %31, %32 : vector<8x128xf32>
    %34 = math.tanh %33 : vector<8x128xf32>
    %35 = vector.broadcast %21 : vector<1x128xf32> to vector<8x128xf32>
    %36 = arith.mulf %34, %35 : vector<8x128xf32>
    %37 = vector.broadcast %24 : vector<1x128xf32> to vector<8x128xf32>
    %38 = arith.addf %36, %37 : vector<8x128xf32>
    %39 = vector.extract_strided_slice %38 {offsets = [0, 0], sizes = [8, 32], strides = [1, 1]} : vector<8x128xf32> to vector<8x32xf32>
    %40 = vector.extract_strided_slice %38 {offsets = [0, 32], sizes = [8, 32], strides = [1, 1]} : vector<8x128xf32> to vector<8x32xf32>
    %41 = vector.extract_strided_slice %38 {offsets = [0, 64], sizes = [8, 32], strides = [1, 1]} : vector<8x128xf32> to vector<8x32xf32>
    %42 = vector.extract_strided_slice %38 {offsets = [0, 96], sizes = [8, 32], strides = [1, 1]} : vector<8x128xf32> to vector<8x32xf32>
    %43 = arith.mulf %40, %26 : vector<8x32xf32>
    %44 = arith.mulf %39, %41 : vector<8x32xf32>
    %45 = arith.addf %43, %44 : vector<8x32xf32>
    %46 = math.tanh %45 : vector<8x32xf32>
    %47 = arith.mulf %42, %46 : vector<8x32xf32>
    %c0_24 = arith.constant 0 : index
    %c0_25 = arith.constant 0 : index
    %48 = vector.load %arg7[%c0_24, %c0_25] : memref<8x32xf32, #tpu.memory_space<vmem>>, vector<8x32xf32>
    tpu.vector_store %arg7[%c0_24, %c0_25], %47 {strides = array<i32>} : memref<8x32xf32, #tpu.memory_space<vmem>>, vector<8x32xf32>,
    %c0_26 = arith.constant 0 : index
    %c0_27 = arith.constant 0 : index
    %49 = vector.load %arg8[%c0_26, %c0_27] : memref<8x32xf32, #tpu.memory_space<vmem>>, vector<8x32xf32>
    tpu.vector_store %arg8[%c0_26, %c0_27], %45 {strides = array<i32>} : memref<8x32xf32, #tpu.memory_space<vmem>>, vector<8x32xf32>,
    %50 = arith.index_cast %c0_i32_16 : i32 to index
    %c0_28 = arith.constant 0 : index
    %c0_29 = arith.constant 0 : index
    %51 = vector.load %arg6[%50, %c0_28, %c0_29] : memref<4x8x32xf32, #tpu.memory_space<vmem>>, vector<1x8x32xf32>
    %52 = vector.shape_cast %51 : vector<1x8x32xf32> to vector<8x32xf32>
    %53 = vector.shape_cast %47 : vector<8x32xf32> to vector<1x8x32xf32>
    tpu.vector_store %arg6[%50, %c0_28, %c0_29], %53 {strides = array<i32>} : memref<4x8x32xf32, #tpu.memory_space<vmem>>, vector<1x8x32xf32>,
    %c1_i32 = arith.constant 1 : i32
    %c0_30 = arith.constant 0 : index
    %c0_31 = arith.constant 0 : index
    %54 = vector.load %arg7[%c0_30, %c0_31] : memref<8x32xf32, #tpu.memory_space<vmem>>, vector<8x32xf32>
    %c0_32 = arith.constant 0 : index
    %c0_33 = arith.constant 0 : index
    %55 = vector.load %arg8[%c0_32, %c0_33] : memref<8x32xf32, #tpu.memory_space<vmem>>, vector<8x32xf32>
    %56 = arith.index_cast %c1_i32 : i32 to index
    %c0_34 = arith.constant 0 : index
    %c0_35 = arith.constant 0 : index
    %57 = vector.load %arg9[%56, %c0_34, %c0_35] : memref<4x8x128xf32, #tpu.memory_space<vmem>>, vector<1x8x128xf32>
    %58 = vector.shape_cast %57 : vector<1x8x128xf32> to vector<8x128xf32>
    %cst_36 = arith.constant dense<0.000000e+00> : vector<8x128xf32>
    %59 = tpu.matmul %54, %12, %cst_36 {dimension_numbers = #tpu.dot_dimension_numbers<[1], [0], [0], [1], [0, 0, 1, 1], [], []>} : vector<8x32xf32>, vector<32x128xf32>, vector<8x128xf32> -> vector<8x128xf32>
    %60 = arith.addf %58, %59 : vector<8x128xf32>
    %61 = vector.broadcast %21 : vector<1x128xf32> to vector<8x128xf32>
    %62 = arith.mulf %60, %61 : vector<8x128xf32>
    %63 = math.tanh %62 : vector<8x128xf32>
    %64 = vector.broadcast %21 : vector<1x128xf32> to vector<8x128xf32>
    %65 = arith.mulf %63, %64 : vector<8x128xf32>
    %66 = vector.broadcast %24 : vector<1x128xf32> to vector<8x128xf32>
    %67 = arith.addf %65, %66 : vector<8x128xf32>
    %68 = vector.extract_strided_slice %67 {offsets = [0, 0], sizes = [8, 32], strides = [1, 1]} : vector<8x128xf32> to vector<8x32xf32>
    %69 = vector.extract_strided_slice %67 {offsets = [0, 32], sizes = [8, 32], strides = [1, 1]} : vector<8x128xf32> to vector<8x32xf32>
    %70 = vector.extract_strided_slice %67 {offsets = [0, 64], sizes = [8, 32], strides = [1, 1]} : vector<8x128xf32> to vector<8x32xf32>
    %71 = vector.extract_strided_slice %67 {offsets = [0, 96], sizes = [8, 32], strides = [1, 1]} : vector<8x128xf32> to vector<8x32xf32>
    %72 = arith.mulf %69, %55 : vector<8x32xf32>
    %73 = arith.mulf %68, %70 : vector<8x32xf32>
    %74 = arith.addf %72, %73 : vector<8x32xf32>
    %75 = math.tanh %74 : vector<8x32xf32>
    %76 = arith.mulf %71, %75 : vector<8x32xf32>
    %c0_37 = arith.constant 0 : index
    %c0_38 = arith.constant 0 : index
    %77 = vector.load %arg7[%c0_37, %c0_38] : memref<8x32xf32, #tpu.memory_space<vmem>>, vector<8x32xf32>
    tpu.vector_store %arg7[%c0_37, %c0_38], %76 {strides = array<i32>} : memref<8x32xf32, #tpu.memory_space<vmem>>, vector<8x32xf32>,
    %c0_39 = arith.constant 0 : index
    %c0_40 = arith.constant 0 : index
    %78 = vector.load %arg8[%c0_39, %c0_40] : memref<8x32xf32, #tpu.memory_space<vmem>>, vector<8x32xf32>
    tpu.vector_store %arg8[%c0_39, %c0_40], %74 {strides = array<i32>} : memref<8x32xf32, #tpu.memory_space<vmem>>, vector<8x32xf32>,
    %79 = arith.index_cast %c1_i32 : i32 to index
    %c0_41 = arith.constant 0 : index
    %c0_42 = arith.constant 0 : index
    %80 = vector.load %arg6[%79, %c0_41, %c0_42] : memref<4x8x32xf32, #tpu.memory_space<vmem>>, vector<1x8x32xf32>
    %81 = vector.shape_cast %80 : vector<1x8x32xf32> to vector<8x32xf32>
    %82 = vector.shape_cast %76 : vector<8x32xf32> to vector<1x8x32xf32>
    tpu.vector_store %arg6[%79, %c0_41, %c0_42], %82 {strides = array<i32>} : memref<4x8x32xf32, #tpu.memory_space<vmem>>, vector<1x8x32xf32>,
    %c2_i32 = arith.constant 2 : i32
    %c0_43 = arith.constant 0 : index
    %c0_44 = arith.constant 0 : index
    %83 = vector.load %arg7[%c0_43, %c0_44] : memref<8x32xf32, #tpu.memory_space<vmem>>, vector<8x32xf32>
    %c0_45 = arith.constant 0 : index
    %c0_46 = arith.constant 0 : index
    %84 = vector.load %arg8[%c0_45, %c0_46] : memref<8x32xf32, #tpu.memory_space<vmem>>, vector<8x32xf32>
    %85 = arith.index_cast %c2_i32 : i32 to index
    %c0_47 = arith.constant 0 : index
    %c0_48 = arith.constant 0 : index
    %86 = vector.load %arg9[%85, %c0_47, %c0_48] : memref<4x8x128xf32, #tpu.memory_space<vmem>>, vector<1x8x128xf32>
    %87 = vector.shape_cast %86 : vector<1x8x128xf32> to vector<8x128xf32>
    %cst_49 = arith.constant dense<0.000000e+00> : vector<8x128xf32>
    %88 = tpu.matmul %83, %12, %cst_49 {dimension_numbers = #tpu.dot_dimension_numbers<[1], [0], [0], [1], [0, 0, 1, 1], [], []>} : vector<8x32xf32>, vector<32x128xf32>, vector<8x128xf32> -> vector<8x128xf32>
    %89 = arith.addf %87, %88 : vector<8x128xf32>
    %90 = vector.broadcast %21 : vector<1x128xf32> to vector<8x128xf32>
    %91 = arith.mulf %89, %90 : vector<8x128xf32>
    %92 = math.tanh %91 : vector<8x128xf32>
    %93 = vector.broadcast %21 : vector<1x128xf32> to vector<8x128xf32>
    %94 = arith.mulf %92, %93 : vector<8x128xf32>
    %95 = vector.broadcast %24 : vector<1x128xf32> to vector<8x128xf32>
    %96 = arith.addf %94, %95 : vector<8x128xf32>
    %97 = vector.extract_strided_slice %96 {offsets = [0, 0], sizes = [8, 32], strides = [1, 1]} : vector<8x128xf32> to vector<8x32xf32>
    %98 = vector.extract_strided_slice %96 {offsets = [0, 32], sizes = [8, 32], strides = [1, 1]} : vector<8x128xf32> to vector<8x32xf32>
    %99 = vector.extract_strided_slice %96 {offsets = [0, 64], sizes = [8, 32], strides = [1, 1]} : vector<8x128xf32> to vector<8x32xf32>
    %100 = vector.extract_strided_slice %96 {offsets = [0, 96], sizes = [8, 32], strides = [1, 1]} : vector<8x128xf32> to vector<8x32xf32>
    %101 = arith.mulf %98, %84 : vector<8x32xf32>
    %102 = arith.mulf %97, %99 : vector<8x32xf32>
    %103 = arith.addf %101, %102 : vector<8x32xf32>
    %104 = math.tanh %103 : vector<8x32xf32>
    %105 = arith.mulf %100, %104 : vector<8x32xf32>
    %c0_50 = arith.constant 0 : index
    %c0_51 = arith.constant 0 : index
    %106 = vector.load %arg7[%c0_50, %c0_51] : memref<8x32xf32, #tpu.memory_space<vmem>>, vector<8x32xf32>
    tpu.vector_store %arg7[%c0_50, %c0_51], %105 {strides = array<i32>} : memref<8x32xf32, #tpu.memory_space<vmem>>, vector<8x32xf32>,
    %c0_52 = arith.constant 0 : index
    %c0_53 = arith.constant 0 : index
    %107 = vector.load %arg8[%c0_52, %c0_53] : memref<8x32xf32, #tpu.memory_space<vmem>>, vector<8x32xf32>
    tpu.vector_store %arg8[%c0_52, %c0_53], %103 {strides = array<i32>} : memref<8x32xf32, #tpu.memory_space<vmem>>, vector<8x32xf32>,
    %108 = arith.index_cast %c2_i32 : i32 to index
    %c0_54 = arith.constant 0 : index
    %c0_55 = arith.constant 0 : index
    %109 = vector.load %arg6[%108, %c0_54, %c0_55] : memref<4x8x32xf32, #tpu.memory_space<vmem>>, vector<1x8x32xf32>
    %110 = vector.shape_cast %109 : vector<1x8x32xf32> to vector<8x32xf32>
    %111 = vector.shape_cast %105 : vector<8x32xf32> to vector<1x8x32xf32>
    tpu.vector_store %arg6[%108, %c0_54, %c0_55], %111 {strides = array<i32>} : memref<4x8x32xf32, #tpu.memory_space<vmem>>, vector<1x8x32xf32>,
    %c3_i32 = arith.constant 3 : i32
    %c0_56 = arith.constant 0 : index
    %c0_57 = arith.constant 0 : index
    %112 = vector.load %arg7[%c0_56, %c0_57] : memref<8x32xf32, #tpu.memory_space<vmem>>, vector<8x32xf32>
    %c0_58 = arith.constant 0 : index
    %c0_59 = arith.constant 0 : index
    %113 = vector.load %arg8[%c0_58, %c0_59] : memref<8x32xf32, #tpu.memory_space<vmem>>, vector<8x32xf32>
    %114 = arith.index_cast %c3_i32 : i32 to index
    %c0_60 = arith.constant 0 : index
    %c0_61 = arith.constant 0 : index
    %115 = vector.load %arg9[%114, %c0_60, %c0_61] : memref<4x8x128xf32, #tpu.memory_space<vmem>>, vector<1x8x128xf32>
    %116 = vector.shape_cast %115 : vector<1x8x128xf32> to vector<8x128xf32>
    %cst_62 = arith.constant dense<0.000000e+00> : vector<8x128xf32>
    %117 = tpu.matmul %112, %12, %cst_62 {dimension_numbers = #tpu.dot_dimension_numbers<[1], [0], [0], [1], [0, 0, 1, 1], [], []>} : vector<8x32xf32>, vector<32x128xf32>, vector<8x128xf32> -> vector<8x128xf32>
    %118 = arith.addf %116, %117 : vector<8x128xf32>
    %119 = vector.broadcast %21 : vector<1x128xf32> to vector<8x128xf32>
    %120 = arith.mulf %118, %119 : vector<8x128xf32>
    %121 = math.tanh %120 : vector<8x128xf32>
    %122 = vector.broadcast %21 : vector<1x128xf32> to vector<8x128xf32>
    %123 = arith.mulf %121, %122 : vector<8x128xf32>
    %124 = vector.broadcast %24 : vector<1x128xf32> to vector<8x128xf32>
    %125 = arith.addf %123, %124 : vector<8x128xf32>
    %126 = vector.extract_strided_slice %125 {offsets = [0, 0], sizes = [8, 32], strides = [1, 1]} : vector<8x128xf32> to vector<8x32xf32>
    %127 = vector.extract_strided_slice %125 {offsets = [0, 32], sizes = [8, 32], strides = [1, 1]} : vector<8x128xf32> to vector<8x32xf32>
    %128 = vector.extract_strided_slice %125 {offsets = [0, 64], sizes = [8, 32], strides = [1, 1]} : vector<8x128xf32> to vector<8x32xf32>
    %129 = vector.extract_strided_slice %125 {offsets = [0, 96], sizes = [8, 32], strides = [1, 1]} : vector<8x128xf32> to vector<8x32xf32>
    %130 = arith.mulf %127, %113 : vector<8x32xf32>
    %131 = arith.mulf %126, %128 : vector<8x32xf32>
    %132 = arith.addf %130, %131 : vector<8x32xf32>
    %133 = math.tanh %132 : vector<8x32xf32>
    %134 = arith.mulf %129, %133 : vector<8x32xf32>
    %c0_63 = arith.constant 0 : index
    %c0_64 = arith.constant 0 : index
    %135 = vector.load %arg7[%c0_63, %c0_64] : memref<8x32xf32, #tpu.memory_space<vmem>>, vector<8x32xf32>
    tpu.vector_store %arg7[%c0_63, %c0_64], %134 {strides = array<i32>} : memref<8x32xf32, #tpu.memory_space<vmem>>, vector<8x32xf32>,
    %c0_65 = arith.constant 0 : index
    %c0_66 = arith.constant 0 : index
    %136 = vector.load %arg8[%c0_65, %c0_66] : memref<8x32xf32, #tpu.memory_space<vmem>>, vector<8x32xf32>
    tpu.vector_store %arg8[%c0_65, %c0_66], %132 {strides = array<i32>} : memref<8x32xf32, #tpu.memory_space<vmem>>, vector<8x32xf32>,
    %137 = arith.index_cast %c3_i32 : i32 to index
    %c0_67 = arith.constant 0 : index
    %c0_68 = arith.constant 0 : index
    %138 = vector.load %arg6[%137, %c0_67, %c0_68] : memref<4x8x32xf32, #tpu.memory_space<vmem>>, vector<1x8x32xf32>
    %139 = vector.shape_cast %138 : vector<1x8x32xf32> to vector<8x32xf32>
    %140 = vector.shape_cast %134 : vector<8x32xf32> to vector<1x8x32xf32>
    tpu.vector_store %arg6[%137, %c0_67, %c0_68], %140 {strides = array<i32>} : memref<4x8x32xf32, #tpu.memory_space<vmem>>, vector<1x8x32xf32>,
    %c4_i32 = arith.constant 4 : i32
    return
  }
  func.func @transform_0(%arg0: i32, %arg1: i32) -> (i32, i32, i32) {
    %c0_i32 = arith.constant 0 : i32
    %c0_i32_0 = arith.constant 0 : i32
    return %arg1, %arg0, %c0_i32 : i32, i32, i32
  }
  func.func @transform_1(%arg0: i32, %arg1: i32) -> (i32, i32) {
    %c0_i32 = arith.constant 0 : i32
    %c0_i32_0 = arith.constant 0 : i32
    %c0_i32_1 = arith.constant 0 : i32
    return %c0_i32, %c0_i32_0 : i32, i32
  }
  func.func @transform_2(%arg0: i32, %arg1: i32) -> (i32, i32) {
    %c0_i32 = arith.constant 0 : i32
    %c0_i32_0 = arith.constant 0 : i32
    %c0_i32_1 = arith.constant 0 : i32
    return %c0_i32, %c0_i32_0 : i32, i32
  }
  func.func @transform_3(%arg0: i32, %arg1: i32) -> (i32, i32) {
    %c0_i32 = arith.constant 0 : i32
    %c0_i32_0 = arith.constant 0 : i32
    %c0_i32_1 = arith.constant 0 : i32
    return %c0_i32, %c0_i32_0 : i32, i32
  }
  func.func @transform_4(%arg0: i32, %arg1: i32) -> (i32, i32, i32) {
    %c0_i32 = arith.constant 0 : i32
    %c0_i32_0 = arith.constant 0 : i32
    return %arg1, %arg0, %c0_i32 : i32, i32, i32
  }
}

module attributes {stable_mosaic.version = 11 : i64} {
  func.func @_lstm_last_fc_kernel(%arg0: i32, %arg1: i32, %arg2: memref<4x8x32xf32, #tpu.memory_space<vmem>>, %arg3: memref<32x128xf32, #tpu.memory_space<vmem>>, %arg4: memref<32x128xf32, #tpu.memory_space<vmem>>, %arg5: memref<1x128xf32, #tpu.memory_space<vmem>>, %arg6: memref<32x1xf32, #tpu.memory_space<vmem>>, %arg7: memref<1x1xf32, #tpu.memory_space<vmem>>, %arg8: memref<8x1xf32, #tpu.memory_space<vmem>>, %arg9: memref<8x32xf32, #tpu.memory_space<vmem>>, %arg10: memref<8x32xf32, #tpu.memory_space<vmem>>, %arg11: memref<4x8x128xf32, #tpu.memory_space<vmem>>) attributes {dimension_semantics = [#tpu.dimension_semantics<parallel>, #tpu.dimension_semantics<arbitrary>], iteration_bounds = array<i64: 1, 2>, scalar_prefetch = 0 : i64, scratch_operands = 3 : i64, tpu.core_type = #tpu.core_type<tc>, window_params = [{transform_indices = @transform_0, window_bounds = array<i64: 4, 8, 32>}, {pipeline_mode = #tpu.pipeline_mode<synchronous>, transform_indices = @transform_1, window_bounds = array<i64: 32, 128>}, {pipeline_mode = #tpu.pipeline_mode<synchronous>, transform_indices = @transform_2, window_bounds = array<i64: 32, 128>}, {pipeline_mode = #tpu.pipeline_mode<synchronous>, transform_indices = @transform_3, window_bounds = array<i64: 1, 128>}, {pipeline_mode = #tpu.pipeline_mode<synchronous>, transform_indices = @transform_4, window_bounds = array<i64: 32, 1>}, {pipeline_mode = #tpu.pipeline_mode<synchronous>, transform_indices = @transform_5, window_bounds = array<i64: 1, 1>}, {transform_indices = @transform_6, window_bounds = array<i64: 8, 1>}]} {
    %c0_i32 = arith.constant 0 : i32
    %0 = arith.cmpi eq, %arg1, %c0_i32 : i32
    %1 = arith.extui %0 : i1 to i32
    %c0_i32_0 = arith.constant 0 : i32
    %2 = arith.cmpi ne, %1, %c0_i32_0 : i32
    scf.if %2 {
      %cst_63 = arith.constant 0.000000e+00 : f32
      %128 = vector.broadcast %cst_63 : f32 to vector<8x32xf32>
      %c0_64 = arith.constant 0 : index
      %c0_65 = arith.constant 0 : index
      %129 = vector.load %arg9[%c0_64, %c0_65] : memref<8x32xf32, #tpu.memory_space<vmem>>, vector<8x32xf32>
      tpu.vector_store %arg9[%c0_64, %c0_65], %128 {strides = array<i32>} : memref<8x32xf32, #tpu.memory_space<vmem>>, vector<8x32xf32>,
      %cst_66 = arith.constant 0.000000e+00 : f32
      %130 = vector.broadcast %cst_66 : f32 to vector<8x32xf32>
      %c0_67 = arith.constant 0 : index
      %c0_68 = arith.constant 0 : index
      %131 = vector.load %arg10[%c0_67, %c0_68] : memref<8x32xf32, #tpu.memory_space<vmem>>, vector<8x32xf32>
      tpu.vector_store %arg10[%c0_67, %c0_68], %130 {strides = array<i32>} : memref<8x32xf32, #tpu.memory_space<vmem>>, vector<8x32xf32>,
    } else {
    }
    %c0 = arith.constant 0 : index
    %c0_1 = arith.constant 0 : index
    %c0_2 = arith.constant 0 : index
    %3 = vector.load %arg2[%c0, %c0_1, %c0_2] : memref<4x8x32xf32, #tpu.memory_space<vmem>>, vector<4x8x32xf32>
    %4 = vector.shape_cast %3 : vector<4x8x32xf32> to vector<32x32xf32>
    %c0_3 = arith.constant 0 : index
    %c0_4 = arith.constant 0 : index
    %5 = vector.load %arg3[%c0_3, %c0_4] : memref<32x128xf32, #tpu.memory_space<vmem>>, vector<32x128xf32>
    %cst = arith.constant dense<0.000000e+00> : vector<32x128xf32>
    %6 = tpu.matmul %4, %5, %cst {dimension_numbers = #tpu.dot_dimension_numbers<[1], [0], [0], [1], [0, 0, 1, 1], [], []>} : vector<32x32xf32>, vector<32x128xf32>, vector<32x128xf32> -> vector<32x128xf32>
    %c0_5 = arith.constant 0 : index
    %c0_6 = arith.constant 0 : index
    %7 = vector.load %arg5[%c0_5, %c0_6] : memref<1x128xf32, #tpu.memory_space<vmem>>, vector<1x128xf32>
    %8 = vector.broadcast %7 : vector<1x128xf32> to vector<32x128xf32>
    %9 = arith.addf %6, %8 : vector<32x128xf32>
    %10 = vector.shape_cast %9 : vector<32x128xf32> to vector<4x8x128xf32>
    %c0_7 = arith.constant 0 : index
    %c0_8 = arith.constant 0 : index
    %c0_9 = arith.constant 0 : index
    %11 = vector.load %arg11[%c0_7, %c0_8, %c0_9] : memref<4x8x128xf32, #tpu.memory_space<vmem>>, vector<4x8x128xf32>
    tpu.vector_store %arg11[%c0_7, %c0_8, %c0_9], %10 {strides = array<i32>} : memref<4x8x128xf32, #tpu.memory_space<vmem>>, vector<4x8x128xf32>,
    %c0_10 = arith.constant 0 : index
    %c0_11 = arith.constant 0 : index
    %12 = vector.load %arg4[%c0_10, %c0_11] : memref<32x128xf32, #tpu.memory_space<vmem>>, vector<32x128xf32>
    %13 = tpu.iota {dimensions = array<i32: 1>} : vector<1x128xi32>
    %c64_i32 = arith.constant 64 : i32
    %14 = vector.broadcast %c64_i32 : i32 to vector<1x128xi32>
    %15 = arith.cmpi sge, %13, %14 : vector<1x128xi32>
    %c96_i32 = arith.constant 96 : i32
    %16 = vector.broadcast %c96_i32 : i32 to vector<1x128xi32>
    %17 = arith.cmpi slt, %13, %16 : vector<1x128xi32>
    %18 = arith.andi %15, %17 : vector<1x128xi1>
    %cst_12 = arith.constant 1.000000e+00 : f32
    %cst_13 = arith.constant 5.000000e-01 : f32
    %19 = vector.broadcast %cst_12 : f32 to vector<1x128xf32>
    %20 = vector.broadcast %cst_13 : f32 to vector<1x128xf32>
    %21 = arith.select %18, %19, %20 : vector<1x128xi1>, vector<1x128xf32>
    %cst_14 = arith.constant 0.000000e+00 : f32
    %cst_15 = arith.constant 5.000000e-01 : f32
    %22 = vector.broadcast %cst_14 : f32 to vector<1x128xf32>
    %23 = vector.broadcast %cst_15 : f32 to vector<1x128xf32>
    %24 = arith.select %18, %22, %23 : vector<1x128xi1>, vector<1x128xf32>
    %c0_i32_16 = arith.constant 0 : i32
    %c0_17 = arith.constant 0 : index
    %c0_18 = arith.constant 0 : index
    %25 = vector.load %arg9[%c0_17, %c0_18] : memref<8x32xf32, #tpu.memory_space<vmem>>, vector<8x32xf32>
    %c0_19 = arith.constant 0 : index
    %c0_20 = arith.constant 0 : index
    %26 = vector.load %arg10[%c0_19, %c0_20] : memref<8x32xf32, #tpu.memory_space<vmem>>, vector<8x32xf32>
    %27 = arith.index_cast %c0_i32_16 : i32 to index
    %c0_21 = arith.constant 0 : index
    %c0_22 = arith.constant 0 : index
    %28 = vector.load %arg11[%27, %c0_21, %c0_22] : memref<4x8x128xf32, #tpu.memory_space<vmem>>, vector<1x8x128xf32>
    %29 = vector.shape_cast %28 : vector<1x8x128xf32> to vector<8x128xf32>
    %cst_23 = arith.constant dense<0.000000e+00> : vector<8x128xf32>
    %30 = tpu.matmul %25, %12, %cst_23 {dimension_numbers = #tpu.dot_dimension_numbers<[1], [0], [0], [1], [0, 0, 1, 1], [], []>} : vector<8x32xf32>, vector<32x128xf32>, vector<8x128xf32> -> vector<8x128xf32>
    %31 = arith.addf %29, %30 : vector<8x128xf32>
    %32 = vector.broadcast %21 : vector<1x128xf32> to vector<8x128xf32>
    %33 = arith.mulf %31, %32 : vector<8x128xf32>
    %34 = math.tanh %33 : vector<8x128xf32>
    %35 = vector.broadcast %21 : vector<1x128xf32> to vector<8x128xf32>
    %36 = arith.mulf %34, %35 : vector<8x128xf32>
    %37 = vector.broadcast %24 : vector<1x128xf32> to vector<8x128xf32>
    %38 = arith.addf %36, %37 : vector<8x128xf32>
    %39 = vector.extract_strided_slice %38 {offsets = [0, 0], sizes = [8, 32], strides = [1, 1]} : vector<8x128xf32> to vector<8x32xf32>
    %40 = vector.extract_strided_slice %38 {offsets = [0, 32], sizes = [8, 32], strides = [1, 1]} : vector<8x128xf32> to vector<8x32xf32>
    %41 = vector.extract_strided_slice %38 {offsets = [0, 64], sizes = [8, 32], strides = [1, 1]} : vector<8x128xf32> to vector<8x32xf32>
    %42 = vector.extract_strided_slice %38 {offsets = [0, 96], sizes = [8, 32], strides = [1, 1]} : vector<8x128xf32> to vector<8x32xf32>
    %43 = arith.mulf %40, %26 : vector<8x32xf32>
    %44 = arith.mulf %39, %41 : vector<8x32xf32>
    %45 = arith.addf %43, %44 : vector<8x32xf32>
    %46 = math.tanh %45 : vector<8x32xf32>
    %47 = arith.mulf %42, %46 : vector<8x32xf32>
    %c0_24 = arith.constant 0 : index
    %c0_25 = arith.constant 0 : index
    %48 = vector.load %arg9[%c0_24, %c0_25] : memref<8x32xf32, #tpu.memory_space<vmem>>, vector<8x32xf32>
    tpu.vector_store %arg9[%c0_24, %c0_25], %47 {strides = array<i32>} : memref<8x32xf32, #tpu.memory_space<vmem>>, vector<8x32xf32>,
    %c0_26 = arith.constant 0 : index
    %c0_27 = arith.constant 0 : index
    %49 = vector.load %arg10[%c0_26, %c0_27] : memref<8x32xf32, #tpu.memory_space<vmem>>, vector<8x32xf32>
    tpu.vector_store %arg10[%c0_26, %c0_27], %45 {strides = array<i32>} : memref<8x32xf32, #tpu.memory_space<vmem>>, vector<8x32xf32>,
    %c1_i32 = arith.constant 1 : i32
    %c0_28 = arith.constant 0 : index
    %c0_29 = arith.constant 0 : index
    %50 = vector.load %arg9[%c0_28, %c0_29] : memref<8x32xf32, #tpu.memory_space<vmem>>, vector<8x32xf32>
    %c0_30 = arith.constant 0 : index
    %c0_31 = arith.constant 0 : index
    %51 = vector.load %arg10[%c0_30, %c0_31] : memref<8x32xf32, #tpu.memory_space<vmem>>, vector<8x32xf32>
    %52 = arith.index_cast %c1_i32 : i32 to index
    %c0_32 = arith.constant 0 : index
    %c0_33 = arith.constant 0 : index
    %53 = vector.load %arg11[%52, %c0_32, %c0_33] : memref<4x8x128xf32, #tpu.memory_space<vmem>>, vector<1x8x128xf32>
    %54 = vector.shape_cast %53 : vector<1x8x128xf32> to vector<8x128xf32>
    %cst_34 = arith.constant dense<0.000000e+00> : vector<8x128xf32>
    %55 = tpu.matmul %50, %12, %cst_34 {dimension_numbers = #tpu.dot_dimension_numbers<[1], [0], [0], [1], [0, 0, 1, 1], [], []>} : vector<8x32xf32>, vector<32x128xf32>, vector<8x128xf32> -> vector<8x128xf32>
    %56 = arith.addf %54, %55 : vector<8x128xf32>
    %57 = vector.broadcast %21 : vector<1x128xf32> to vector<8x128xf32>
    %58 = arith.mulf %56, %57 : vector<8x128xf32>
    %59 = math.tanh %58 : vector<8x128xf32>
    %60 = vector.broadcast %21 : vector<1x128xf32> to vector<8x128xf32>
    %61 = arith.mulf %59, %60 : vector<8x128xf32>
    %62 = vector.broadcast %24 : vector<1x128xf32> to vector<8x128xf32>
    %63 = arith.addf %61, %62 : vector<8x128xf32>
    %64 = vector.extract_strided_slice %63 {offsets = [0, 0], sizes = [8, 32], strides = [1, 1]} : vector<8x128xf32> to vector<8x32xf32>
    %65 = vector.extract_strided_slice %63 {offsets = [0, 32], sizes = [8, 32], strides = [1, 1]} : vector<8x128xf32> to vector<8x32xf32>
    %66 = vector.extract_strided_slice %63 {offsets = [0, 64], sizes = [8, 32], strides = [1, 1]} : vector<8x128xf32> to vector<8x32xf32>
    %67 = vector.extract_strided_slice %63 {offsets = [0, 96], sizes = [8, 32], strides = [1, 1]} : vector<8x128xf32> to vector<8x32xf32>
    %68 = arith.mulf %65, %51 : vector<8x32xf32>
    %69 = arith.mulf %64, %66 : vector<8x32xf32>
    %70 = arith.addf %68, %69 : vector<8x32xf32>
    %71 = math.tanh %70 : vector<8x32xf32>
    %72 = arith.mulf %67, %71 : vector<8x32xf32>
    %c0_35 = arith.constant 0 : index
    %c0_36 = arith.constant 0 : index
    %73 = vector.load %arg9[%c0_35, %c0_36] : memref<8x32xf32, #tpu.memory_space<vmem>>, vector<8x32xf32>
    tpu.vector_store %arg9[%c0_35, %c0_36], %72 {strides = array<i32>} : memref<8x32xf32, #tpu.memory_space<vmem>>, vector<8x32xf32>,
    %c0_37 = arith.constant 0 : index
    %c0_38 = arith.constant 0 : index
    %74 = vector.load %arg10[%c0_37, %c0_38] : memref<8x32xf32, #tpu.memory_space<vmem>>, vector<8x32xf32>
    tpu.vector_store %arg10[%c0_37, %c0_38], %70 {strides = array<i32>} : memref<8x32xf32, #tpu.memory_space<vmem>>, vector<8x32xf32>,
    %c2_i32 = arith.constant 2 : i32
    %c0_39 = arith.constant 0 : index
    %c0_40 = arith.constant 0 : index
    %75 = vector.load %arg9[%c0_39, %c0_40] : memref<8x32xf32, #tpu.memory_space<vmem>>, vector<8x32xf32>
    %c0_41 = arith.constant 0 : index
    %c0_42 = arith.constant 0 : index
    %76 = vector.load %arg10[%c0_41, %c0_42] : memref<8x32xf32, #tpu.memory_space<vmem>>, vector<8x32xf32>
    %77 = arith.index_cast %c2_i32 : i32 to index
    %c0_43 = arith.constant 0 : index
    %c0_44 = arith.constant 0 : index
    %78 = vector.load %arg11[%77, %c0_43, %c0_44] : memref<4x8x128xf32, #tpu.memory_space<vmem>>, vector<1x8x128xf32>
    %79 = vector.shape_cast %78 : vector<1x8x128xf32> to vector<8x128xf32>
    %cst_45 = arith.constant dense<0.000000e+00> : vector<8x128xf32>
    %80 = tpu.matmul %75, %12, %cst_45 {dimension_numbers = #tpu.dot_dimension_numbers<[1], [0], [0], [1], [0, 0, 1, 1], [], []>} : vector<8x32xf32>, vector<32x128xf32>, vector<8x128xf32> -> vector<8x128xf32>
    %81 = arith.addf %79, %80 : vector<8x128xf32>
    %82 = vector.broadcast %21 : vector<1x128xf32> to vector<8x128xf32>
    %83 = arith.mulf %81, %82 : vector<8x128xf32>
    %84 = math.tanh %83 : vector<8x128xf32>
    %85 = vector.broadcast %21 : vector<1x128xf32> to vector<8x128xf32>
    %86 = arith.mulf %84, %85 : vector<8x128xf32>
    %87 = vector.broadcast %24 : vector<1x128xf32> to vector<8x128xf32>
    %88 = arith.addf %86, %87 : vector<8x128xf32>
    %89 = vector.extract_strided_slice %88 {offsets = [0, 0], sizes = [8, 32], strides = [1, 1]} : vector<8x128xf32> to vector<8x32xf32>
    %90 = vector.extract_strided_slice %88 {offsets = [0, 32], sizes = [8, 32], strides = [1, 1]} : vector<8x128xf32> to vector<8x32xf32>
    %91 = vector.extract_strided_slice %88 {offsets = [0, 64], sizes = [8, 32], strides = [1, 1]} : vector<8x128xf32> to vector<8x32xf32>
    %92 = vector.extract_strided_slice %88 {offsets = [0, 96], sizes = [8, 32], strides = [1, 1]} : vector<8x128xf32> to vector<8x32xf32>
    %93 = arith.mulf %90, %76 : vector<8x32xf32>
    %94 = arith.mulf %89, %91 : vector<8x32xf32>
    %95 = arith.addf %93, %94 : vector<8x32xf32>
    %96 = math.tanh %95 : vector<8x32xf32>
    %97 = arith.mulf %92, %96 : vector<8x32xf32>
    %c0_46 = arith.constant 0 : index
    %c0_47 = arith.constant 0 : index
    %98 = vector.load %arg9[%c0_46, %c0_47] : memref<8x32xf32, #tpu.memory_space<vmem>>, vector<8x32xf32>
    tpu.vector_store %arg9[%c0_46, %c0_47], %97 {strides = array<i32>} : memref<8x32xf32, #tpu.memory_space<vmem>>, vector<8x32xf32>,
    %c0_48 = arith.constant 0 : index
    %c0_49 = arith.constant 0 : index
    %99 = vector.load %arg10[%c0_48, %c0_49] : memref<8x32xf32, #tpu.memory_space<vmem>>, vector<8x32xf32>
    tpu.vector_store %arg10[%c0_48, %c0_49], %95 {strides = array<i32>} : memref<8x32xf32, #tpu.memory_space<vmem>>, vector<8x32xf32>,
    %c3_i32 = arith.constant 3 : i32
    %c0_50 = arith.constant 0 : index
    %c0_51 = arith.constant 0 : index
    %100 = vector.load %arg9[%c0_50, %c0_51] : memref<8x32xf32, #tpu.memory_space<vmem>>, vector<8x32xf32>
    %c0_52 = arith.constant 0 : index
    %c0_53 = arith.constant 0 : index
    %101 = vector.load %arg10[%c0_52, %c0_53] : memref<8x32xf32, #tpu.memory_space<vmem>>, vector<8x32xf32>
    %102 = arith.index_cast %c3_i32 : i32 to index
    %c0_54 = arith.constant 0 : index
    %c0_55 = arith.constant 0 : index
    %103 = vector.load %arg11[%102, %c0_54, %c0_55] : memref<4x8x128xf32, #tpu.memory_space<vmem>>, vector<1x8x128xf32>
    %104 = vector.shape_cast %103 : vector<1x8x128xf32> to vector<8x128xf32>
    %cst_56 = arith.constant dense<0.000000e+00> : vector<8x128xf32>
    %105 = tpu.matmul %100, %12, %cst_56 {dimension_numbers = #tpu.dot_dimension_numbers<[1], [0], [0], [1], [0, 0, 1, 1], [], []>} : vector<8x32xf32>, vector<32x128xf32>, vector<8x128xf32> -> vector<8x128xf32>
    %106 = arith.addf %104, %105 : vector<8x128xf32>
    %107 = vector.broadcast %21 : vector<1x128xf32> to vector<8x128xf32>
    %108 = arith.mulf %106, %107 : vector<8x128xf32>
    %109 = math.tanh %108 : vector<8x128xf32>
    %110 = vector.broadcast %21 : vector<1x128xf32> to vector<8x128xf32>
    %111 = arith.mulf %109, %110 : vector<8x128xf32>
    %112 = vector.broadcast %24 : vector<1x128xf32> to vector<8x128xf32>
    %113 = arith.addf %111, %112 : vector<8x128xf32>
    %114 = vector.extract_strided_slice %113 {offsets = [0, 0], sizes = [8, 32], strides = [1, 1]} : vector<8x128xf32> to vector<8x32xf32>
    %115 = vector.extract_strided_slice %113 {offsets = [0, 32], sizes = [8, 32], strides = [1, 1]} : vector<8x128xf32> to vector<8x32xf32>
    %116 = vector.extract_strided_slice %113 {offsets = [0, 64], sizes = [8, 32], strides = [1, 1]} : vector<8x128xf32> to vector<8x32xf32>
    %117 = vector.extract_strided_slice %113 {offsets = [0, 96], sizes = [8, 32], strides = [1, 1]} : vector<8x128xf32> to vector<8x32xf32>
    %118 = arith.mulf %115, %101 : vector<8x32xf32>
    %119 = arith.mulf %114, %116 : vector<8x32xf32>
    %120 = arith.addf %118, %119 : vector<8x32xf32>
    %121 = math.tanh %120 : vector<8x32xf32>
    %122 = arith.mulf %117, %121 : vector<8x32xf32>
    %c0_57 = arith.constant 0 : index
    %c0_58 = arith.constant 0 : index
    %123 = vector.load %arg9[%c0_57, %c0_58] : memref<8x32xf32, #tpu.memory_space<vmem>>, vector<8x32xf32>
    tpu.vector_store %arg9[%c0_57, %c0_58], %122 {strides = array<i32>} : memref<8x32xf32, #tpu.memory_space<vmem>>, vector<8x32xf32>,
    %c0_59 = arith.constant 0 : index
    %c0_60 = arith.constant 0 : index
    %124 = vector.load %arg10[%c0_59, %c0_60] : memref<8x32xf32, #tpu.memory_space<vmem>>, vector<8x32xf32>
    tpu.vector_store %arg10[%c0_59, %c0_60], %120 {strides = array<i32>} : memref<8x32xf32, #tpu.memory_space<vmem>>, vector<8x32xf32>,
    %c4_i32 = arith.constant 4 : i32
    %c1_i32_61 = arith.constant 1 : i32
    %125 = arith.cmpi eq, %arg1, %c1_i32_61 : i32
    %126 = arith.extui %125 : i1 to i32
    %c0_i32_62 = arith.constant 0 : i32
    %127 = arith.cmpi ne, %126, %c0_i32_62 : i32
    scf.if %127 {
      %c0_63 = arith.constant 0 : index
      %c0_64 = arith.constant 0 : index
      %128 = vector.load %arg9[%c0_63, %c0_64] : memref<8x32xf32, #tpu.memory_space<vmem>>, vector<8x32xf32>
      %c0_65 = arith.constant 0 : index
      %c0_66 = arith.constant 0 : index
      %129 = vector.load %arg6[%c0_65, %c0_66] : memref<32x1xf32, #tpu.memory_space<vmem>>, vector<32x1xf32>
      %cst_67 = arith.constant dense<0.000000e+00> : vector<8x1xf32>
      %130 = tpu.matmul %128, %129, %cst_67 {dimension_numbers = #tpu.dot_dimension_numbers<[1], [0], [0], [1], [0, 0, 1, 1], [], []>} : vector<8x32xf32>, vector<32x1xf32>, vector<8x1xf32> -> vector<8x1xf32>
      %c0_68 = arith.constant 0 : index
      %c0_69 = arith.constant 0 : index
      %131 = vector.load %arg7[%c0_68, %c0_69] : memref<1x1xf32, #tpu.memory_space<vmem>>, vector<1x1xf32>
      %132 = vector.broadcast %131 : vector<1x1xf32> to vector<8x1xf32>
      %133 = arith.addf %130, %132 : vector<8x1xf32>
      %c0_70 = arith.constant 0 : index
      %c0_71 = arith.constant 0 : index
      %134 = vector.load %arg8[%c0_70, %c0_71] : memref<8x1xf32, #tpu.memory_space<vmem>>, vector<8x1xf32>
      tpu.vector_store %arg8[%c0_70, %c0_71], %133 {strides = array<i32>} : memref<8x1xf32, #tpu.memory_space<vmem>>, vector<8x1xf32>,
    } else {
    }
    return
  }
  func.func @transform_0(%arg0: i32, %arg1: i32) -> (i32, i32, i32) {
    %c0_i32 = arith.constant 0 : i32
    %c0_i32_0 = arith.constant 0 : i32
    return %arg1, %arg0, %c0_i32 : i32, i32, i32
  }
  func.func @transform_1(%arg0: i32, %arg1: i32) -> (i32, i32) {
    %c0_i32 = arith.constant 0 : i32
    %c0_i32_0 = arith.constant 0 : i32
    %c0_i32_1 = arith.constant 0 : i32
    return %c0_i32, %c0_i32_0 : i32, i32
  }
  func.func @transform_2(%arg0: i32, %arg1: i32) -> (i32, i32) {
    %c0_i32 = arith.constant 0 : i32
    %c0_i32_0 = arith.constant 0 : i32
    %c0_i32_1 = arith.constant 0 : i32
    return %c0_i32, %c0_i32_0 : i32, i32
  }
  func.func @transform_3(%arg0: i32, %arg1: i32) -> (i32, i32) {
    %c0_i32 = arith.constant 0 : i32
    %c0_i32_0 = arith.constant 0 : i32
    %c0_i32_1 = arith.constant 0 : i32
    return %c0_i32, %c0_i32_0 : i32, i32
  }
  func.func @transform_4(%arg0: i32, %arg1: i32) -> (i32, i32) {
    %c0_i32 = arith.constant 0 : i32
    %c0_i32_0 = arith.constant 0 : i32
    %c0_i32_1 = arith.constant 0 : i32
    return %c0_i32, %c0_i32_0 : i32, i32
  }
  func.func @transform_5(%arg0: i32, %arg1: i32) -> (i32, i32) {
    %c0_i32 = arith.constant 0 : i32
    %c0_i32_0 = arith.constant 0 : i32
    %c0_i32_1 = arith.constant 0 : i32
    return %c0_i32, %c0_i32_0 : i32, i32
  }
  func.func @transform_6(%arg0: i32, %arg1: i32) -> (i32, i32) {
    %c0_i32 = arith.constant 0 : i32
    %c0_i32_0 = arith.constant 0 : i32
    return %arg0, %c0_i32 : i32, i32
  }
}

</mosaic_0001>

<llo_original>
// kernel: lstm_speedup_predictor.2
$region0: #{lstm_speedup_predictor.2}
  #allocation0 [shape = 'u32[]', space=smem, size = 0x4, offset = 0x4, fixed_abs, tag = 'smem constant byte address 0x4 - core index']
  #allocation1 [shape = 'u32[144,128]{1,0:T(1,128)}', space=vmem, size = 0x12000, scoped, tag = 'internal scratch']
  #allocation2 [shape = 'f32[8,32]{1,0:T(8,128)}', space=vmem, size = 0x1000, scoped, tag = 'scratch operand']
  #allocation3 [shape = 'f32[8,32]{1,0:T(8,128)}', space=vmem, size = 0x1000, scoped, tag = 'scratch operand']
  #allocation4 [shape = 'f32[4,8,128]{2,1,0:T(8,128)}', space=vmem, size = 0x4000, scoped, tag = 'scratch operand']
  %s0 = inlined_call_operand.vmem [shape: f32[8,8,4], index: 0, kind: input, shape index: {}]
  %s1 = inlined_call_operand.vmem [shape: f32[4,128], index: 1, kind: input, shape index: {}]
  %s2 = inlined_call_operand.vmem [shape: f32[32,128], index: 2, kind: input, shape index: {}]
  %s3 = inlined_call_operand.vmem [shape: f32[1,128], index: 3, kind: input, shape index: {}]
  %s4 = inlined_call_operand.vmem [shape: f32[8,8,32], index: 4, kind: output, shape index: {}]
  %s5 = sld [smem:[#allocation0]]
  $region53: #{lstm_speedup_predictor.2} parent=0
    _
  %s7 = ssub.s32 1, %s5
  %s8 = scalar_select 0, %s7, %s5
  loop: start=0, step=1, limit=4
  $region2: #{lstm_speedup_predictor.2} parent=0 // loop_pre_header
    _
  $region3: #{lstm_speedup_predictor.2} parent=0 // loop_header
    %s10 = sphi 0, %s14
    %p11 = scmp.ge.s32.totalorder %s10, 4
    %s17 = sphi 0, %s29
    %s18 = sphi 0, %s25
    %s19 = sphi 0, %s17
    %s20 = sphi 0, %s18
    %s21 = sphi 0, %s19
    %s22 = sphi 0, %s20
    %s34 = sphi 0, %s36
    %s37 = sphi 0, %s34
    %s38 = sphi 0, %s37
    %s54 = sphi 0, %s38
    %s58 = sphi 0, %s58
    %s60 = sphi 0, %s58
    %s61 = sphi 0, %s60
    %s75 = sphi 0, %s61
    %s79 = sphi 0, %s79
    %s81 = sphi 0, %s79
    %s82 = sphi 0, %s81
    %s96 = sphi 0, %s82
    %s100 = sphi 0, %s100
    %s102 = sphi 0, %s100
    %s103 = sphi 0, %s102
    %s117 = sphi 0, %s103
    %s125 = sphi 0, %s127
    %s128 = sphi 0, %s125
    %s129 = sphi 0, %s128
    %s145 = sphi 0, %s129
  $region4: #{lstm_speedup_predictor.2} parent=0 // loop_header_branch
    %13 = sbr.rel (%p11) target = $region8
  $region5: #{lstm_speedup_predictor.2} parent=0 // loop_body
    %s15 = ssub.s32 %s10, 1
    %s16 = ssub.s32 %s10, 2
    %s23 = sadd.s32 1, %s18
    %p24 = scmp.ge.s32.totalorder %s23, 2
    %s25 = scalar_select %p24, 0, %s23
    %s26 = sadd.s32 1, %s17
    %s27 = scalar_select %p24, %s26, %s17
    %p28 = scmp.ge.s32.totalorder %s27, 1
    %s29 = scalar_select %p28, 0, %s27
    %s30 = ssub.s32 %s18, %s25
    %s31 = ssub.s32 %s17, %s29
    %s32 = sor.u32 %s30, %s31
    %p33 = scmp.eq.s32.totalorder %s32, 0
    %s35 = sadd.s32 %s34, 1
    %s36 = scalar_select %p33, %s34, %s35
    %p39 = pneg %p33
    %p40 = scmp.eq.s32.totalorder %s10, 1
    %p41 = por %p39, %p40
    %p42 = scmp.ne.s32.totalorder %s34, %s37
    %p43 = scmp.eq.s32.totalorder %s10, 0
    %p44 = por %p42, %p43
    %p45 = scmp.ne.s32.totalorder %s34, %s37
    %p46 = scmp.eq.s32.totalorder %s15, 1
    %p47 = por %p45, %p46
    %p48 = scmp.ne.s32.totalorder %s37, %s38
    %p49 = scmp.eq.s32.totalorder %s15, 0
    %p50 = por %p48, %p49
    %p51 = scmp.ne.s32.totalorder %s37, %s38
    %p52 = scmp.eq.s32.totalorder %s16, 1
    %p53 = por %p51, %p52
    %p55 = scmp.ne.s32.totalorder %s38, %s54
    %p56 = scmp.eq.s32.totalorder %s16, 0
    %p57 = por %p55, %p56
    %s59 = sadd.s32 %s58, 1
    %p62 = scmp.eq.s32.totalorder %s10, 1
    %p63 = scmp.ne.s32.totalorder %s58, %s60
    %p64 = scmp.eq.s32.totalorder %s10, 0
    %p65 = por %p63, %p64
    %p66 = scmp.ne.s32.totalorder %s58, %s60
    %p67 = scmp.eq.s32.totalorder %s15, 1
    %p68 = por %p66, %p67
    %p69 = scmp.ne.s32.totalorder %s60, %s61
    %p70 = scmp.eq.s32.totalorder %s15, 0
    %p71 = por %p69, %p70
    %p72 = scmp.ne.s32.totalorder %s60, %s61
    %p73 = scmp.eq.s32.totalorder %s16, 1
    %p74 = por %p72, %p73
    %p76 = scmp.ne.s32.totalorder %s61, %s75
    %p77 = scmp.eq.s32.totalorder %s16, 0
    %p78 = por %p76, %p77
    %s80 = sadd.s32 %s79, 1
    %p83 = scmp.eq.s32.totalorder %s10, 1
    %p84 = scmp.ne.s32.totalorder %s79, %s81
    %p85 = scmp.eq.s32.totalorder %s10, 0
    %p86 = por %p84, %p85
    %p87 = scmp.ne.s32.totalorder %s79, %s81
    %p88 = scmp.eq.s32.totalorder %s15, 1
    %p89 = por %p87, %p88
    %p90 = scmp.ne.s32.totalorder %s81, %s82
    %p91 = scmp.eq.s32.totalorder %s15, 0
    %p92 = por %p90, %p91
    %p93 = scmp.ne.s32.totalorder %s81, %s82
    %p94 = scmp.eq.s32.totalorder %s16, 1
    %p95 = por %p93, %p94
    %p97 = scmp.ne.s32.totalorder %s82, %s96
    %p98 = scmp.eq.s32.totalorder %s16, 0
    %p99 = por %p97, %p98
    %s101 = sadd.s32 %s100, 1
    %p104 = scmp.eq.s32.totalorder %s10, 1
    %p105 = scmp.ne.s32.totalorder %s100, %s102
    %p106 = scmp.eq.s32.totalorder %s10, 0
    %p107 = por %p105, %p106
    %p108 = scmp.ne.s32.totalorder %s100, %s102
    %p109 = scmp.eq.s32.totalorder %s15, 1
    %p110 = por %p108, %p109
    %p111 = scmp.ne.s32.totalorder %s102, %s103
    %p112 = scmp.eq.s32.totalorder %s15, 0
    %p113 = por %p111, %p112
    %p114 = scmp.ne.s32.totalorder %s102, %s103
    %p115 = scmp.eq.s32.totalorder %s16, 1
    %p116 = por %p114, %p115
    %p118 = scmp.ne.s32.totalorder %s103, %s117
    %p119 = scmp.eq.s32.totalorder %s16, 0
    %p120 = por %p118, %p119
    %s121 = ssub.s32 %s18, %s25
    %s122 = ssub.s32 %s17, %s29
    %s123 = sor.u32 %s121, %s122
    %p124 = scmp.eq.s32.totalorder %s123, 0
    %s126 = sadd.s32 %s125, 1
    %s127 = scalar_select %p124, %s125, %s126
    %p130 = pneg %p124
    %p131 = scmp.eq.s32.totalorder %s10, 1
    %p132 = por %p130, %p131
    %p133 = scmp.ne.s32.totalorder %s125, %s128
    %p134 = scmp.eq.s32.totalorder %s10, 0
    %p135 = por %p133, %p134
    %p136 = scmp.ne.s32.totalorder %s125, %s128
    %p137 = scmp.eq.s32.totalorder %s15, 1
    %p138 = por %p136, %p137
    %p139 = scmp.ne.s32.totalorder %s128, %s129
    %p140 = scmp.eq.s32.totalorder %s15, 0
    %p141 = por %p139, %p140
    %p142 = scmp.ne.s32.totalorder %s128, %s129
    %p143 = scmp.eq.s32.totalorder %s16, 1
    %p144 = por %p142, %p143
    %p146 = scmp.ne.s32.totalorder %s129, %s145
    %p147 = scmp.eq.s32.totalorder %s16, 0
    %p148 = por %p146, %p147
    %p149 = scmp.le.s32.totalorder 1, %s10
    %p150 = scmp.lt.s32.totalorder %s10, 3
    %p151 = pnand %p149, %p150
    %p152 = pneg %p151
    // Predicated region
    $region9: #{lstm_speedup_predictor.2} parent=5 // pred_check
      _
    $region10: #{lstm_speedup_predictor.2} parent=5 // pred_check_branch
      %154 = sbr.rel (%p151) target = $region12
    $region11: #{lstm_speedup_predictor.2} parent=5 // pred_region
      %s155 = ssub.s32 %s10, 1
      // Predicated region
      $region13: #{lstm_speedup_predictor.2} parent=11 // pred_check
        %p156 = pneg %p71
      $region14: #{lstm_speedup_predictor.2} parent=11 // pred_check_branch
        %158 = sbr.rel (%p156) target = $region16
      $region15: #{lstm_speedup_predictor.2} parent=11 // pred_region
        _
      $region16: #{lstm_speedup_predictor.2} parent=11 // pred_fallthru
        _
      // Predicated region
      $region17: #{lstm_speedup_predictor.2} parent=11 // pred_check
        %p159 = pneg %p92
      $region18: #{lstm_speedup_predictor.2} parent=11 // pred_check_branch
        %161 = sbr.rel (%p159) target = $region20
      $region19: #{lstm_speedup_predictor.2} parent=11 // pred_region
        _
      $region20: #{lstm_speedup_predictor.2} parent=11 // pred_fallthru
        _
      // Predicated region
      $region21: #{lstm_speedup_predictor.2} parent=11 // pred_check
        %p162 = pneg %p113
      $region22: #{lstm_speedup_predictor.2} parent=11 // pred_check_branch
        %164 = sbr.rel (%p162) target = $region24
      $region23: #{lstm_speedup_predictor.2} parent=11 // pred_region
        _
      $region24: #{lstm_speedup_predictor.2} parent=11 // pred_fallthru
        _
    $region12: #{lstm_speedup_predictor.2} parent=5 // pred_fallthru
      _
    %p165 = scmp.lt.s32.totalorder %s10, 2
    // Predicated region
    $region25: #{lstm_speedup_predictor.2} parent=5 // pred_check
      %p166 = pneg %p165
    $region26: #{lstm_speedup_predictor.2} parent=5 // pred_check_branch
      %168 = sbr.rel (%p166) target = $region28
    $region27: #{lstm_speedup_predictor.2} parent=5 // pred_region
      // Predicated region
      $region29: #{lstm_speedup_predictor.2} parent=27 // pred_check
        %p169 = pneg %p44
      $region30: #{lstm_speedup_predictor.2} parent=27 // pred_check_branch
        %171 = sbr.rel (%p169) target = $region32
      $region31: #{lstm_speedup_predictor.2} parent=27 // pred_region
        %s172 = smul.u32 4, %s18
        %p173 = scmp.lt.s32.totalorder %s172, 7
        %s174 = scalar_select %p173, %s172, 7
        %p175 = scmp.lt.s32.totalorder %s17, 0
        %s176 = scalar_select %p175, %s17, 0
        %s177 = sadd.s32 %s176, %s174
        %s178 = smul.addr %s177, 8
        %s179 = scalar_lea.vmem %s0, %s178
        %s180 = smul.u32 4, %s18
      $region32: #{lstm_speedup_predictor.2} parent=27 // pred_fallthru
        _
    $region28: #{lstm_speedup_predictor.2} parent=5 // pred_fallthru
      _
    %p181 = scmp.le.s32.totalorder 1, %s10
    %p182 = scmp.lt.s32.totalorder %s10, 3
    %p183 = pnand %p181, %p182
    %p184 = pneg %p183
    // Predicated region
    $region33: #{lstm_speedup_predictor.2} parent=5 // pred_check
      _
    $region34: #{lstm_speedup_predictor.2} parent=5 // pred_check_branch
      %186 = sbr.rel (%p183) target = $region36
    $region35: #{lstm_speedup_predictor.2} parent=5 // pred_region
      %s187 = ssub.s32 %s10, 1
      %s188 = smul.u32 4, %s20
      %p189 = scmp.lt.s32.totalorder %s188, 7
      %s190 = scalar_select %p189, %s188, 7
      %p191 = scmp.lt.s32.totalorder %s19, 0
      %s192 = scalar_select %p191, %s19, 0
      %s193 = sadd.s32 %s192, %s190
      %s194 = smul.addr %s193, 8
      %s195 = scalar_lea.vmem %s0, %s194
      %p196 = pneg %p50
      %p197 = pneg %p47
      %p198 = pneg %p71
      %p199 = pneg %p68
      %p200 = pneg %p92
      %p201 = pneg %p89
      %p202 = pneg %p113
      %p203 = pneg %p110
      %p204 = pneg %p141
      %p205 = pneg %p138
      %s206 = smul.u32 4, %s20
      %p207 = scmp.lt.s32.totalorder %s206, 7
      %s208 = scalar_select %p207, %s206, 7
      %p209 = scmp.lt.s32.totalorder %s19, 0
      %s210 = scalar_select %p209, %s19, 0
      %s211 = sadd.s32 %s210, %s208
      %s212 = smul.addr %s211, 8
      %s213 = scalar_lea.vmem %s4, %s212
      %s214 = smul.u32 4, %s20
      %p215 = scmp.lt.s32.totalorder %s214, 7
      %s216 = scalar_select %p215, %s214, 7
      %p217 = scmp.lt.s32.totalorder %s19, 0
      %s218 = scalar_select %p217, %s19, 0
      %s219 = sadd.s32 %s218, %s216
      %s220 = smul.addr %s219, 8
      %s221 = scalar_lea.vmem %s0, %s220
      %s222 = smul.u32 4, %s20
      %s223 = smul.u32 4, %s20
      %p224 = scmp.lt.s32.totalorder %s223, 7
      %s225 = scalar_select %p224, %s223, 7
      %p226 = scmp.lt.s32.totalorder %s19, 0
      %s227 = scalar_select %p226, %s19, 0
      %s228 = sadd.s32 %s227, %s225
      %s229 = smul.addr %s228, 8
      %s230 = scalar_lea.vmem %s4, %s229
      %s231 = smul.u32 4, %s20
      %p232 = scmp.eq.s32.totalorder %s20, 0
      // Predicated region
      $region37: #{lstm_speedup_predictor.2} parent=35 // pred_check
        %p233 = pneg %p232
      $region38: #{lstm_speedup_predictor.2} parent=35 // pred_check_branch
        %235 = sbr.rel (%p233) target = $region40
      $region39: #{lstm_speedup_predictor.2} parent=35 // pred_region
        %vm236 = vcmask 261120
        %237 = vst.msk [vmem:[#allocation2] sm:$0xff] %vm236, 0.0
        %238 = vst.msk [vmem:[#allocation3] sm:$0xff] %vm236, 0.0
      $region40: #{lstm_speedup_predictor.2} parent=35 // pred_fallthru
        _
      %v239 = vld [vmem:[%s221] sm:$0xff]
      %v240 = vld [vmem:[%s221 + $0x8] sm:$0xff]
      %v241 = vld [vmem:[%s221 + $0x10] sm:$0xff]
      %v242 = vld [vmem:[%s221 + $0x18] sm:$0xff]
      %v243 = vld [vmem:[%s1] sm:$0xf]
      %v244 = vld [vmem:[%s3] sm:$0x1]
      %v246 = vlaneseq
      %v247 = vshrl.u32 %v246, 7
      %v248 = vsub.s32 0, %v247
      %v249 = vrot.slane %v244, %v248
      %vm251 = vcmask 31744
      %v253 = vsel %vm251, %v239, 0
      %v256 = vsel %vm251, %v240, 0
      %v259 = vsel %vm251, %v241, 0
      %v262 = vsel %vm251, %v242, 0
      %vm264 = vcmask 1043456
      %v266 = vsel %vm264, %v243, 0
      %268 = vmatprep.subr.mxu0 0.0
      %269 = vmatpush1.msra.mxu0 %v266
      %270 = vmatprep.subr.mxu0 0.0
      %271 = vmatpush1.msra.mxu0 0.0
      %272 = vmatprep.subr.mxu0 0.0
      %273 = vmatpush1.msra.mxu0 0.0
      %274 = vmatprep.subr.mxu0 0.0
      %275 = vmatpush1.msra.mxu0 0.0
      %276 = vmatprep.subr.mxu0 0.0
      %277 = vmatpush1.msra.mxu0 0.0
      %278 = vmatprep.subr.mxu0 0.0
      %279 = vmatpush1.msra.mxu0 0.0
      %280 = vmatprep.subr.mxu0 0.0
      %281 = vmatpush1.msra.mxu0 0.0
      %282 = vmatprep.subr.mxu0 0.0
      %283 = vmatpush1.msra.mxu0 0.0
      %284 = vmatprep.subr.mxu0 0.0
      %285 = vmatpush1.msra.mxu0 0.0
      %286 = vmatprep.subr.mxu0 0.0
      %287 = vmatpush1.msra.mxu0 0.0
      %288 = vmatprep.subr.mxu0 0.0
      %289 = vmatpush1.msra.mxu0 0.0
      %290 = vmatprep.subr.mxu0 0.0
      %291 = vmatpush1.msra.mxu0 0.0
      %292 = vmatprep.subr.mxu0 0.0
      %293 = vmatpush1.msra.mxu0 0.0
      %294 = vmatprep.subr.mxu0 0.0
      %295 = vmatpush1.msra.mxu0 0.0
      %296 = vmatprep.subr.mxu0 0.0
      %297 = vmatpush1.msra.mxu0 0.0
      %298 = vmatprep.subr.mxu0 0.0
      %299 = vmatpush1.msra.mxu0 0.0
      %300 = vmatprep.subr.mxu0 0.0
      %301 = vmatpush1.msra.mxu0 0.0
      %302 = vmatprep.subr.mxu0 0.0
      %303 = vmatpush1.msra.mxu0 0.0
      %304 = vmatprep.subr.mxu0 0.0
      %305 = vmatpush1.msra.mxu0 0.0
      %306 = vmatprep.subr.mxu0 0.0
      %307 = vmatpush1.msra.mxu0 0.0
      %308 = vmatprep.subr.mxu0 0.0
      %309 = vmatpush1.msra.mxu0 0.0
      %310 = vmatprep.subr.mxu0 0.0
      %311 = vmatpush1.msra.mxu0 0.0
      %312 = vmatprep.subr.mxu0 0.0
      %313 = vmatpush1.msra.mxu0 0.0
      %314 = vmatprep.subr.mxu0 0.0
      %315 = vmatpush1.msra.mxu0 0.0
      %316 = vmatprep.subr.mxu0 0.0
      %317 = vmatpush1.msra.mxu0 0.0
      %318 = vmatprep.subr.mxu0 0.0
      %319 = vmatpush1.msra.mxu0 0.0
      %320 = vmatprep.subr.mxu0 0.0
      %321 = vmatpush1.msra.mxu0 0.0
      %322 = vmatprep.subr.mxu0 0.0
      %323 = vmatpush1.msra.mxu0 0.0
      %324 = vmatprep.subr.mxu0 0.0
      %325 = vmatpush1.msra.mxu0 0.0
      %326 = vmatprep.subr.mxu0 0.0
      %327 = vmatpush1.msra.mxu0 0.0
      %328 = vmatprep.subr.mxu0 0.0
      %329 = vmatpush1.msra.mxu0 0.0
      %330 = vmatprep.subr.mxu0 0.0
      %331 = vmatpush1.msra.mxu0 0.0
      %332 = vmatprep.mubr.f32.mxu0 0.0
      %333 = vmatmul.mubr.f32.gmra.mrb[0].mxu0 %v253
      %v334 = vpop.f32.mrb[0].mxu0
      %v335 = vadd.f32 %v249, %v334
      %v336 = vpop.f32.mrb[0].mxu0
      %337 = vmatprep.mubr.f32.mxu0 0.0
      %338 = vmatmul.mubr.f32.gmra.mrb[0].mxu0 %v256
      %v339 = vpop.f32.mrb[0].mxu0
      %v340 = vadd.f32 %v249, %v339
      %v341 = vpop.f32.mrb[0].mxu0
      %342 = vmatprep.mubr.f32.mxu0 0.0
      %343 = vmatmul.mubr.f32.gmra.mrb[0].mxu0 %v259
      %v344 = vpop.f32.mrb[0].mxu0
      %v345 = vadd.f32 %v249, %v344
      %v346 = vpop.f32.mrb[0].mxu0
      %347 = vmatprep.mubr.f32.mxu0 0.0
      %348 = vmatmul.mubr.f32.gmra.mrb[0].mxu0 %v262
      %v349 = vpop.f32.mrb[0].mxu0
      %v350 = vadd.f32 %v249, %v349
      %v351 = vpop.f32.mrb[0].mxu0
      %352 = vdwg.mxu0
      %353 = vst [vmem:[#allocation4] sm:$0xff] %v335
      %354 = vst [vmem:[#allocation4 + $0x8] sm:$0xff] %v340
      %355 = vst [vmem:[#allocation4 + $0x10] sm:$0xff] %v345
      %356 = vst [vmem:[#allocation4 + $0x18] sm:$0xff] %v350
      %v357 = vld [vmem:[%s2] sm:$0xff]
      %v358 = vld [vmem:[%s2 + $0x8] sm:$0xff]
      %v359 = vld [vmem:[%s2 + $0x10] sm:$0xff]
      %v360 = vld [vmem:[%s2 + $0x18] sm:$0xff]
      %v361 = vlaneseq
      %v362 = vand.u32 %v361, 127
      %vm363 = vcmp.ge.s32.totalorder %v362, 64
      %vm364 = vcmp.lt.s32.totalorder %v362, 96
      %vm365 = vmand %vm363, %vm364
      %v366 = vsel %vm365, 1.0, 0.5
      %v367 = vsel %vm365, 0.0, 0.5
      %v368 = vld [vmem:[#allocation2] sm:$0xff]
      %v369 = vld [vmem:[#allocation3] sm:$0xff]
      %v370 = vld [vmem:[#allocation4] sm:$0xff]
      %vm371 = vcmask 261120
      %v373 = vsel %vm371, %v368, 0
      %375 = vmatprep.subr.mxu0 0.0
      %376 = vmatpush1.msra.mxu0 %v357
      %377 = vmatprep.subr.mxu0 0.0
      %378 = vmatpush1.msra.mxu0 %v358
      %379 = vmatprep.subr.mxu0 0.0
      %380 = vmatpush1.msra.mxu0 %v359
      %381 = vmatprep.subr.mxu0 0.0
      %382 = vmatpush1.msra.mxu0 %v360
      %383 = vmatprep.subr.mxu0 0.0
      %384 = vmatpush1.msra.mxu0 0.0
      %385 = vmatprep.subr.mxu0 0.0
      %386 = vmatpush1.msra.mxu0 0.0
      %387 = vmatprep.subr.mxu0 0.0
      %388 = vmatpush1.msra.mxu0 0.0
      %389 = vmatprep.subr.mxu0 0.0
      %390 = vmatpush1.msra.mxu0 0.0
      %391 = vmatprep.subr.mxu0 0.0
      %392 = vmatpush1.msra.mxu0 0.0
      %393 = vmatprep.subr.mxu0 0.0
      %394 = vmatpush1.msra.mxu0 0.0
      %395 = vmatprep.subr.mxu0 0.0
      %396 = vmatpush1.msra.mxu0 0.0
      %397 = vmatprep.subr.mxu0 0.0
      %398 = vmatpush1.msra.mxu0 0.0
      %399 = vmatprep.subr.mxu0 0.0
      %400 = vmatpush1.msra.mxu0 0.0
      %401 = vmatprep.subr.mxu0 0.0
      %402 = vmatpush1.msra.mxu0 0.0
      %403 = vmatprep.subr.mxu0 0.0
      %404 = vmatpush1.msra.mxu0 0.0
      %405 = vmatprep.subr.mxu0 0.0
      %406 = vmatpush1.msra.mxu0 0.0
      %407 = vmatprep.subr.mxu0 0.0
      %408 = vmatpush1.msra.mxu0 0.0
      %409 = vmatprep.subr.mxu0 0.0
      %410 = vmatpush1.msra.mxu0 0.0
      %411 = vmatprep.subr.mxu0 0.0
      %412 = vmatpush1.msra.mxu0 0.0
      %413 = vmatprep.subr.mxu0 0.0
      %414 = vmatpush1.msra.mxu0 0.0
      %415 = vmatprep.subr.mxu0 0.0
      %416 = vmatpush1.msra.mxu0 0.0
      %417 = vmatprep.subr.mxu0 0.0
      %418 = vmatpush1.msra.mxu0 0.0
      %419 = vmatprep.subr.mxu0 0.0
      %420 = vmatpush1.msra.mxu0 0.0
      %421 = vmatprep.subr.mxu0 0.0
      %422 = vmatpush1.msra.mxu0 0.0
      %423 = vmatprep.subr.mxu0 0.0
      %424 = vmatpush1.msra.mxu0 0.0
      %425 = vmatprep.subr.mxu0 0.0
      %426 = vmatpush1.msra.mxu0 0.0
      %427 = vmatprep.subr.mxu0 0.0
      %428 = vmatpush1.msra.mxu0 0.0
      %429 = vmatprep.subr.mxu0 0.0
      %430 = vmatpush1.msra.mxu0 0.0
      %431 = vmatprep.subr.mxu0 0.0
      %432 = vmatpush1.msra.mxu0 0.0
      %433 = vmatprep.subr.mxu0 0.0
      %434 = vmatpush1.msra.mxu0 0.0
      %435 = vmatprep.subr.mxu0 0.0
      %436 = vmatpush1.msra.mxu0 0.0
      %437 = vmatprep.subr.mxu0 0.0
      %438 = vmatpush1.msra.mxu0 0.0
      %439 = vmatprep.mubr.f32.mxu0 0.0
      %440 = vmatmul.mubr.f32.gmra.mrb[0].mxu0 %v373
      %v441 = vpop.f32.mrb[0].mxu0
      %v442 = vadd.f32 0.0, %v441
      %v443 = vpop.f32.mrb[0].mxu0
      %444 = vdwg.mxu0
      %v445 = vadd.f32 %v370, %v442
      %v446 = vmul.f32 %v445, %v366
      %v447 = vtanh.pop %v446
      %v448 = vmul.f32 %v447, %v366
      %v449 = vadd.f32 %v448, %v367
      %451 = vrot.lane.b32.xlu0 %v369, 32
      %v452 = vpop.permute.xlu0 %451
      %v454 = vmul.f32 %v449, %v452
      %456 = vrot.lane.b32.xlu0 %v449, 64
      %v457 = vpop.permute.xlu0 %456
      %v459 = vmul.f32 %v449, %v457
      %461 = vrot.lane.b32.xlu0 %v459, 32
      %v462 = vpop.permute.xlu0 %461
      %v464 = vadd.f32 %v454, %v462
      %v465 = vtanh.pop %v464
      %467 = vrot.lane.b32.xlu0 %v465, 64
      %v468 = vpop.permute.xlu0 %467
      %v470 = vmul.f32 %v449, %v468
      %472 = vrot.lane.b32.xlu0 %v470, 32
      %v473 = vpop.permute.xlu0 %472
      %475 = vst.msk [vmem:[#allocation2] sm:$0xff] %vm371, %v473
      %477 = vrot.lane.b32.xlu0 %v464, 96
      %v478 = vpop.permute.xlu0 %477
      %480 = vst.msk [vmem:[#allocation3] sm:$0xff] %vm371, %v478
      %481 = vst.msk [vmem:[%s230] sm:$0xff] %vm371, %v473
      %v482 = vld [vmem:[#allocation2] sm:$0xff]
      %v483 = vld [vmem:[#allocation3] sm:$0xff]
      %s484 = scalar_lea.vmem [#allocation4], 8
      %v485 = vld [vmem:[%s484] sm:$0xff]
      %v487 = vsel %vm371, %v482, 0
      %489 = vmatprep.subr.mxu0 0.0
      %490 = vmatpush1.msra.mxu0 %v357
      %491 = vmatprep.subr.mxu0 0.0
      %492 = vmatpush1.msra.mxu0 %v358
      %493 = vmatprep.subr.mxu0 0.0
      %494 = vmatpush1.msra.mxu0 %v359
      %495 = vmatprep.subr.mxu0 0.0
      %496 = vmatpush1.msra.mxu0 %v360
      %497 = vmatprep.subr.mxu0 0.0
      %498 = vmatpush1.msra.mxu0 0.0
      %499 = vmatprep.subr.mxu0 0.0
      %500 = vmatpush1.msra.mxu0 0.0
      %501 = vmatprep.subr.mxu0 0.0
      %502 = vmatpush1.msra.mxu0 0.0
      %503 = vmatprep.subr.mxu0 0.0
      %504 = vmatpush1.msra.mxu0 0.0
      %505 = vmatprep.subr.mxu0 0.0
      %506 = vmatpush1.msra.mxu0 0.0
      %507 = vmatprep.subr.mxu0 0.0
      %508 = vmatpush1.msra.mxu0 0.0
      %509 = vmatprep.subr.mxu0 0.0
      %510 = vmatpush1.msra.mxu0 0.0
      %511 = vmatprep.subr.mxu0 0.0
      %512 = vmatpush1.msra.mxu0 0.0
      %513 = vmatprep.subr.mxu0 0.0
      %514 = vmatpush1.msra.mxu0 0.0
      %515 = vmatprep.subr.mxu0 0.0
      %516 = vmatpush1.msra.mxu0 0.0
      %517 = vmatprep.subr.mxu0 0.0
      %518 = vmatpush1.msra.mxu0 0.0
      %519 = vmatprep.subr.mxu0 0.0
      %520 = vmatpush1.msra.mxu0 0.0
      %521 = vmatprep.subr.mxu0 0.0
      %522 = vmatpush1.msra.mxu0 0.0
      %523 = vmatprep.subr.mxu0 0.0
      %524 = vmatpush1.msra.mxu0 0.0
      %525 = vmatprep.subr.mxu0 0.0
      %526 = vmatpush1.msra.mxu0 0.0
      %527 = vmatprep.subr.mxu0 0.0
      %528 = vmatpush1.msra.mxu0 0.0
      %529 = vmatprep.subr.mxu0 0.0
      %530 = vmatpush1.msra.mxu0 0.0
      %531 = vmatprep.subr.mxu0 0.0
      %532 = vmatpush1.msra.mxu0 0.0
      %533 = vmatprep.subr.mxu0 0.0
      %534 = vmatpush1.msra.mxu0 0.0
      %535 = vmatprep.subr.mxu0 0.0
      %536 = vmatpush1.msra.mxu0 0.0
      %537 = vmatprep.subr.mxu0 0.0
      %538 = vmatpush1.msra.mxu0 0.0
      %539 = vmatprep.subr.mxu0 0.0
      %540 = vmatpush1.msra.mxu0 0.0
      %541 = vmatprep.subr.mxu0 0.0
      %542 = vmatpush1.msra.mxu0 0.0
      %543 = vmatprep.subr.mxu0 0.0
      %544 = vmatpush1.msra.mxu0 0.0
      %545 = vmatprep.subr.mxu0 0.0
      %546 = vmatpush1.msra.mxu0 0.0
      %547 = vmatprep.subr.mxu0 0.0
      %548 = vmatpush1.msra.mxu0 0.0
      %549 = vmatprep.subr.mxu0 0.0
      %550 = vmatpush1.msra.mxu0 0.0
      %551 = vmatprep.subr.mxu0 0.0
      %552 = vmatpush1.msra.mxu0 0.0
      %553 = vmatprep.mubr.f32.mxu0 0.0
      %554 = vmatmul.mubr.f32.gmra.mrb[0].mxu0 %v487
      %v555 = vpop.f32.mrb[0].mxu0
      %v556 = vadd.f32 0.0, %v555
      %v557 = vpop.f32.mrb[0].mxu0
      %558 = vdwg.mxu0
      %v559 = vadd.f32 %v485, %v556
      %v560 = vmul.f32 %v559, %v366
      %v561 = vtanh.pop %v560
      %v562 = vmul.f32 %v561, %v366
      %v563 = vadd.f32 %v562, %v367
      %565 = vrot.lane.b32.xlu0 %v483, 32
      %v566 = vpop.permute.xlu0 %565
      %v568 = vmul.f32 %v563, %v566
      %570 = vrot.lane.b32.xlu0 %v563, 64
      %v571 = vpop.permute.xlu0 %570
      %v573 = vmul.f32 %v563, %v571
      %575 = vrot.lane.b32.xlu0 %v573, 32
      %v576 = vpop.permute.xlu0 %575
      %v578 = vadd.f32 %v568, %v576
      %v579 = vtanh.pop %v578
      %581 = vrot.lane.b32.xlu0 %v579, 64
      %v582 = vpop.permute.xlu0 %581
      %v584 = vmul.f32 %v563, %v582
      %586 = vrot.lane.b32.xlu0 %v584, 32
      %v587 = vpop.permute.xlu0 %586
      %589 = vst.msk [vmem:[#allocation2] sm:$0xff] %vm371, %v587
      %591 = vrot.lane.b32.xlu0 %v578, 96
      %v592 = vpop.permute.xlu0 %591
      %594 = vst.msk [vmem:[#allocation3] sm:$0xff] %vm371, %v592
      %s595 = scalar_lea.vmem %s230, 8
      %596 = vst.msk [vmem:[%s595] sm:$0xff] %vm371, %v587
      %v597 = vld [vmem:[#allocation2] sm:$0xff]
      %v598 = vld [vmem:[#allocation3] sm:$0xff]
      %s599 = scalar_lea.vmem [#allocation4], 16
      %v600 = vld [vmem:[%s599] sm:$0xff]
      %v602 = vsel %vm371, %v597, 0
      %604 = vmatprep.subr.mxu0 0.0
      %605 = vmatpush1.msra.mxu0 %v357
      %606 = vmatprep.subr.mxu0 0.0
      %607 = vmatpush1.msra.mxu0 %v358
      %608 = vmatprep.subr.mxu0 0.0
      %609 = vmatpush1.msra.mxu0 %v359
      %610 = vmatprep.subr.mxu0 0.0
      %611 = vmatpush1.msra.mxu0 %v360
      %612 = vmatprep.subr.mxu0 0.0
      %613 = vmatpush1.msra.mxu0 0.0
      %614 = vmatprep.subr.mxu0 0.0
      %615 = vmatpush1.msra.mxu0 0.0
      %616 = vmatprep.subr.mxu0 0.0
      %617 = vmatpush1.msra.mxu0 0.0
      %618 = vmatprep.subr.mxu0 0.0
      %619 = vmatpush1.msra.mxu0 0.0
      %620 = vmatprep.subr.mxu0 0.0
      %621 = vmatpush1.msra.mxu0 0.0
      %622 = vmatprep.subr.mxu0 0.0
      %623 = vmatpush1.msra.mxu0 0.0
      %624 = vmatprep.subr.mxu0 0.0
      %625 = vmatpush1.msra.mxu0 0.0
      %626 = vmatprep.subr.mxu0 0.0
      %627 = vmatpush1.msra.mxu0 0.0
      %628 = vmatprep.subr.mxu0 0.0
      %629 = vmatpush1.msra.mxu0 0.0
      %630 = vmatprep.subr.mxu0 0.0
      %631 = vmatpush1.msra.mxu0 0.0
      %632 = vmatprep.subr.mxu0 0.0
      %633 = vmatpush1.msra.mxu0 0.0
      %634 = vmatprep.subr.mxu0 0.0
      %635 = vmatpush1.msra.mxu0 0.0
      %636 = vmatprep.subr.mxu0 0.0
      %637 = vmatpush1.msra.mxu0 0.0
      %638 = vmatprep.subr.mxu0 0.0
      %639 = vmatpush1.msra.mxu0 0.0
      %640 = vmatprep.subr.mxu0 0.0
      %641 = vmatpush1.msra.mxu0 0.0
      %642 = vmatprep.subr.mxu0 0.0
      %643 = vmatpush1.msra.mxu0 0.0
      %644 = vmatprep.subr.mxu0 0.0
      %645 = vmatpush1.msra.mxu0 0.0
      %646 = vmatprep.subr.mxu0 0.0
      %647 = vmatpush1.msra.mxu0 0.0
      %648 = vmatprep.subr.mxu0 0.0
      %649 = vmatpush1.msra.mxu0 0.0
      %650 = vmatprep.subr.mxu0 0.0
      %651 = vmatpush1.msra.mxu0 0.0
      %652 = vmatprep.subr.mxu0 0.0
      %653 = vmatpush1.msra.mxu0 0.0
      %654 = vmatprep.subr.mxu0 0.0
      %655 = vmatpush1.msra.mxu0 0.0
      %656 = vmatprep.subr.mxu0 0.0
      %657 = vmatpush1.msra.mxu0 0.0
      %658 = vmatprep.subr.mxu0 0.0
      %659 = vmatpush1.msra.mxu0 0.0
      %660 = vmatprep.subr.mxu0 0.0
      %661 = vmatpush1.msra.mxu0 0.0
      %662 = vmatprep.subr.mxu0 0.0
      %663 = vmatpush1.msra.mxu0 0.0
      %664 = vmatprep.subr.mxu0 0.0
      %665 = vmatpush1.msra.mxu0 0.0
      %666 = vmatprep.subr.mxu0 0.0
      %667 = vmatpush1.msra.mxu0 0.0
      %668 = vmatprep.mubr.f32.mxu0 0.0
      %669 = vmatmul.mubr.f32.gmra.mrb[0].mxu0 %v602
      %v670 = vpop.f32.mrb[0].mxu0
      %v671 = vadd.f32 0.0, %v670
      %v672 = vpop.f32.mrb[0].mxu0
      %673 = vdwg.mxu0
      %v674 = vadd.f32 %v600, %v671
      %v675 = vmul.f32 %v674, %v366
      %v676 = vtanh.pop %v675
      %v677 = vmul.f32 %v676, %v366
      %v678 = vadd.f32 %v677, %v367
      %680 = vrot.lane.b32.xlu0 %v598, 32
      %v681 = vpop.permute.xlu0 %680
      %v683 = vmul.f32 %v678, %v681
      %685 = vrot.lane.b32.xlu0 %v678, 64
      %v686 = vpop.permute.xlu0 %685
      %v688 = vmul.f32 %v678, %v686
      %690 = vrot.lane.b32.xlu0 %v688, 32
      %v691 = vpop.permute.xlu0 %690
      %v693 = vadd.f32 %v683, %v691
      %v694 = vtanh.pop %v693
      %696 = vrot.lane.b32.xlu0 %v694, 64
      %v697 = vpop.permute.xlu0 %696
      %v699 = vmul.f32 %v678, %v697
      %701 = vrot.lane.b32.xlu0 %v699, 32
      %v702 = vpop.permute.xlu0 %701
      %704 = vst.msk [vmem:[#allocation2] sm:$0xff] %vm371, %v702
      %706 = vrot.lane.b32.xlu0 %v693, 96
      %v707 = vpop.permute.xlu0 %706
      %709 = vst.msk [vmem:[#allocation3] sm:$0xff] %vm371, %v707
      %s710 = scalar_lea.vmem %s230, 16
      %711 = vst.msk [vmem:[%s710] sm:$0xff] %vm371, %v702
      %v712 = vld [vmem:[#allocation2] sm:$0xff]
      %v713 = vld [vmem:[#allocation3] sm:$0xff]
      %s714 = scalar_lea.vmem [#allocation4], 24
      %v715 = vld [vmem:[%s714] sm:$0xff]
      %v717 = vsel %vm371, %v712, 0
      %719 = vmatprep.subr.mxu0 0.0
      %720 = vmatpush1.msra.mxu0 %v357
      %721 = vmatprep.subr.mxu0 0.0
      %722 = vmatpush1.msra.mxu0 %v358
      %723 = vmatprep.subr.mxu0 0.0
      %724 = vmatpush1.msra.mxu0 %v359
      %725 = vmatprep.subr.mxu0 0.0
      %726 = vmatpush1.msra.mxu0 %v360
      %727 = vmatprep.subr.mxu0 0.0
      %728 = vmatpush1.msra.mxu0 0.0
      %729 = vmatprep.subr.mxu0 0.0
      %730 = vmatpush1.msra.mxu0 0.0
      %731 = vmatprep.subr.mxu0 0.0
      %732 = vmatpush1.msra.mxu0 0.0
      %733 = vmatprep.subr.mxu0 0.0
      %734 = vmatpush1.msra.mxu0 0.0
      %735 = vmatprep.subr.mxu0 0.0
      %736 = vmatpush1.msra.mxu0 0.0
      %737 = vmatprep.subr.mxu0 0.0
      %738 = vmatpush1.msra.mxu0 0.0
      %739 = vmatprep.subr.mxu0 0.0
      %740 = vmatpush1.msra.mxu0 0.0
      %741 = vmatprep.subr.mxu0 0.0
      %742 = vmatpush1.msra.mxu0 0.0
      %743 = vmatprep.subr.mxu0 0.0
      %744 = vmatpush1.msra.mxu0 0.0
      %745 = vmatprep.subr.mxu0 0.0
      %746 = vmatpush1.msra.mxu0 0.0
      %747 = vmatprep.subr.mxu0 0.0
      %748 = vmatpush1.msra.mxu0 0.0
      %749 = vmatprep.subr.mxu0 0.0
      %750 = vmatpush1.msra.mxu0 0.0
      %751 = vmatprep.subr.mxu0 0.0
      %752 = vmatpush1.msra.mxu0 0.0
      %753 = vmatprep.subr.mxu0 0.0
      %754 = vmatpush1.msra.mxu0 0.0
      %755 = vmatprep.subr.mxu0 0.0
      %756 = vmatpush1.msra.mxu0 0.0
      %757 = vmatprep.subr.mxu0 0.0
      %758 = vmatpush1.msra.mxu0 0.0
      %759 = vmatprep.subr.mxu0 0.0
      %760 = vmatpush1.msra.mxu0 0.0
      %761 = vmatprep.subr.mxu0 0.0
      %762 = vmatpush1.msra.mxu0 0.0
      %763 = vmatprep.subr.mxu0 0.0
      %764 = vmatpush1.msra.mxu0 0.0
      %765 = vmatprep.subr.mxu0 0.0
      %766 = vmatpush1.msra.mxu0 0.0
      %767 = vmatprep.subr.mxu0 0.0
      %768 = vmatpush1.msra.mxu0 0.0
      %769 = vmatprep.subr.mxu0 0.0
      %770 = vmatpush1.msra.mxu0 0.0
      %771 = vmatprep.subr.mxu0 0.0
      %772 = vmatpush1.msra.mxu0 0.0
      %773 = vmatprep.subr.mxu0 0.0
      %774 = vmatpush1.msra.mxu0 0.0
      %775 = vmatprep.subr.mxu0 0.0
      %776 = vmatpush1.msra.mxu0 0.0
      %777 = vmatprep.subr.mxu0 0.0
      %778 = vmatpush1.msra.mxu0 0.0
      %779 = vmatprep.subr.mxu0 0.0
      %780 = vmatpush1.msra.mxu0 0.0
      %781 = vmatprep.subr.mxu0 0.0
      %782 = vmatpush1.msra.mxu0 0.0
      %783 = vmatprep.mubr.f32.mxu0 0.0
      %784 = vmatmul.mubr.f32.gmra.mrb[0].mxu0 %v717
      %v785 = vpop.f32.mrb[0].mxu0
      %v786 = vadd.f32 0.0, %v785
      %v787 = vpop.f32.mrb[0].mxu0
      %788 = vdwg.mxu0
      %v789 = vadd.f32 %v715, %v786
      %v790 = vmul.f32 %v789, %v366
      %v791 = vtanh.pop %v790
      %v792 = vmul.f32 %v791, %v366
      %v793 = vadd.f32 %v792, %v367
      %795 = vrot.lane.b32.xlu0 %v713, 32
      %v796 = vpop.permute.xlu0 %795
      %v798 = vmul.f32 %v793, %v796
      %800 = vrot.lane.b32.xlu0 %v793, 64
      %v801 = vpop.permute.xlu0 %800
      %v803 = vmul.f32 %v793, %v801
      %805 = vrot.lane.b32.xlu0 %v803, 32
      %v806 = vpop.permute.xlu0 %805
      %v808 = vadd.f32 %v798, %v806
      %v809 = vtanh.pop %v808
      %811 = vrot.lane.b32.xlu0 %v809, 64
      %v812 = vpop.permute.xlu0 %811
      %v814 = vmul.f32 %v793, %v812
      %816 = vrot.lane.b32.xlu0 %v814, 32
      %v817 = vpop.permute.xlu0 %816
      %819 = vst.msk [vmem:[#allocation2] sm:$0xff] %vm371, %v817
      %821 = vrot.lane.b32.xlu0 %v808, 96
      %v822 = vpop.permute.xlu0 %821
      %824 = vst.msk [vmem:[#allocation3] sm:$0xff] %vm371, %v822
      %s825 = scalar_lea.vmem %s230, 24
      %826 = vst.msk [vmem:[%s825] sm:$0xff] %vm371, %v817
      %s827 = smul.u32 4, %s20
      %p828 = scmp.lt.s32.totalorder %s827, 7
      %s829 = scalar_select %p828, %s827, 7
      %p830 = scmp.lt.s32.totalorder %s19, 0
      %s831 = scalar_select %p830, %s19, 0
      %s832 = sadd.s32 %s831, %s829
      %s833 = smul.addr %s832, 8
      %s834 = scalar_lea.vmem %s4, %s833
      // Predicated region
      $region41: #{lstm_speedup_predictor.2} parent=35 // pred_check
        %p835 = pneg %p138
      $region42: #{lstm_speedup_predictor.2} parent=35 // pred_check_branch
        %837 = sbr.rel (%p835) target = $region44
      $region43: #{lstm_speedup_predictor.2} parent=35 // pred_region
        %s838 = smul.u32 4, %s20
      $region44: #{lstm_speedup_predictor.2} parent=35 // pred_fallthru
        _
    $region36: #{lstm_speedup_predictor.2} parent=5 // pred_fallthru
      _
    %p839 = scmp.le.s32.totalorder 2, %s10
    // Predicated region
    $region45: #{lstm_speedup_predictor.2} parent=5 // pred_check
      %p840 = pneg %p839
    $region46: #{lstm_speedup_predictor.2} parent=5 // pred_check_branch
      %842 = sbr.rel (%p840) target = $region48
    $region47: #{lstm_speedup_predictor.2} parent=5 // pred_region
      %s843 = ssub.s32 %s10, 2
      // Predicated region
      $region49: #{lstm_speedup_predictor.2} parent=47 // pred_check
        %p844 = pneg %p144
      $region50: #{lstm_speedup_predictor.2} parent=47 // pred_check_branch
        %846 = sbr.rel (%p844) target = $region52
      $region51: #{lstm_speedup_predictor.2} parent=47 // pred_region
        %s847 = smul.u32 4, %s22
        %p848 = scmp.lt.s32.totalorder %s847, 7
        %s849 = scalar_select %p848, %s847, 7
        %p850 = scmp.lt.s32.totalorder %s21, 0
        %s851 = scalar_select %p850, %s21, 0
        %s852 = sadd.s32 %s851, %s849
        %s853 = smul.addr %s852, 8
        %s854 = scalar_lea.vmem %s4, %s853
      $region52: #{lstm_speedup_predictor.2} parent=47 // pred_fallthru
        _
    $region48: #{lstm_speedup_predictor.2} parent=5 // pred_fallthru
      _
  $region6: #{lstm_speedup_predictor.2} parent=0 // loop_footer
    %s14 = sadd.s32 1, %s10
  $region7: #{lstm_speedup_predictor.2} parent=0 // loop_footer_branch
    %9 = sbr.rel target = $region3
  $region8: #{lstm_speedup_predictor.2} parent=0 // loop_exit
    _

// kernel: lstm_speedup_predictor.3
$region0: #{lstm_speedup_predictor.3}
  #allocation0 [shape = 'u32[]', space=smem, size = 0x4, offset = 0x4, fixed_abs, tag = 'smem constant byte address 0x4 - core index']
  #allocation1 [shape = 'u32[144,128]{1,0:T(1,128)}', space=vmem, size = 0x12000, scoped, tag = 'internal scratch']
  #allocation2 [shape = 'f32[8,32]{1,0:T(8,128)}', space=vmem, size = 0x1000, scoped, tag = 'scratch operand']
  #allocation3 [shape = 'f32[8,32]{1,0:T(8,128)}', space=vmem, size = 0x1000, scoped, tag = 'scratch operand']
  #allocation4 [shape = 'f32[4,8,128]{2,1,0:T(8,128)}', space=vmem, size = 0x4000, scoped, tag = 'scratch operand']
  #allocation5 [shape = 'f32[1,1]{1,0:T(1,128)S(1)}', space=vmem, size = 0x200, scoped, tag = 'scoped memory for lstm_speedup_predictor.3']
  %s0 = inlined_call_operand.vmem [shape: f32[8,8,32], index: 0, kind: input, shape index: {}]
  %s1 = inlined_call_operand.vmem [shape: f32[32,128], index: 1, kind: input, shape index: {}]
  %s2 = inlined_call_operand.vmem [shape: f32[32,128], index: 2, kind: input, shape index: {}]
  %s3 = inlined_call_operand.vmem [shape: f32[1,128], index: 3, kind: input, shape index: {}]
  %s4 = inlined_call_operand.vmem [shape: f32[32,1], index: 4, kind: input, shape index: {}]
  %s5 = inlined_call_operand.<no memory space> [shape: f32[1,1], index: 5, kind: input, shape index: {}]
  %s6 = inlined_call_operand.vmem [shape: f32[8,1], index: 6, kind: output, shape index: {}]
  %s7 = sld [smem:[#allocation0]]
  $region65: #{lstm_speedup_predictor.3} parent=0
    _
  %s9 = ssub.s32 1, %s7
  %s10 = scalar_select 0, %s9, %s7
  %v11 = vstv %s5
  %12 = vst [vmem:[#allocation5] sm:$0x1] %v11
  loop: start=0, step=1, limit=4
  $region2: #{lstm_speedup_predictor.3} parent=0 // loop_pre_header
    _
  $region3: #{lstm_speedup_predictor.3} parent=0 // loop_header
    %s14 = sphi 0, %s18
    %p15 = scmp.ge.s32.totalorder %s14, 4
    %s21 = sphi 0, %s33
    %s22 = sphi 0, %s29
    %s23 = sphi 0, %s21
    %s24 = sphi 0, %s22
    %s25 = sphi 0, %s23
    %s26 = sphi 0, %s24
    %s38 = sphi 0, %s40
    %s41 = sphi 0, %s38
    %s42 = sphi 0, %s41
    %s58 = sphi 0, %s42
    %s62 = sphi 0, %s62
    %s64 = sphi 0, %s62
    %s65 = sphi 0, %s64
    %s79 = sphi 0, %s65
    %s83 = sphi 0, %s83
    %s85 = sphi 0, %s83
    %s86 = sphi 0, %s85
    %s100 = sphi 0, %s86
    %s104 = sphi 0, %s104
    %s106 = sphi 0, %s104
    %s107 = sphi 0, %s106
    %s121 = sphi 0, %s107
    %s125 = sphi 0, %s125
    %s127 = sphi 0, %s125
    %s128 = sphi 0, %s127
    %s142 = sphi 0, %s128
    %s146 = sphi 0, %s146
    %s148 = sphi 0, %s146
    %s149 = sphi 0, %s148
    %s163 = sphi 0, %s149
    %s169 = sphi 0, %s171
    %s172 = sphi 0, %s169
    %s173 = sphi 0, %s172
    %s189 = sphi 0, %s173
  $region4: #{lstm_speedup_predictor.3} parent=0 // loop_header_branch
    %17 = sbr.rel (%p15) target = $region8
  $region5: #{lstm_speedup_predictor.3} parent=0 // loop_body
    %s19 = ssub.s32 %s14, 1
    %s20 = ssub.s32 %s14, 2
    %s27 = sadd.s32 1, %s22
    %p28 = scmp.ge.s32.totalorder %s27, 2
    %s29 = scalar_select %p28, 0, %s27
    %s30 = sadd.s32 1, %s21
    %s31 = scalar_select %p28, %s30, %s21
    %p32 = scmp.ge.s32.totalorder %s31, 1
    %s33 = scalar_select %p32, 0, %s31
    %s34 = ssub.s32 %s22, %s29
    %s35 = ssub.s32 %s21, %s33
    %s36 = sor.u32 %s34, %s35
    %p37 = scmp.eq.s32.totalorder %s36, 0
    %s39 = sadd.s32 %s38, 1
    %s40 = scalar_select %p37, %s38, %s39
    %p43 = pneg %p37
    %p44 = scmp.eq.s32.totalorder %s14, 1
    %p45 = por %p43, %p44
    %p46 = scmp.ne.s32.totalorder %s38, %s41
    %p47 = scmp.eq.s32.totalorder %s14, 0
    %p48 = por %p46, %p47
    %p49 = scmp.ne.s32.totalorder %s38, %s41
    %p50 = scmp.eq.s32.totalorder %s19, 1
    %p51 = por %p49, %p50
    %p52 = scmp.ne.s32.totalorder %s41, %s42
    %p53 = scmp.eq.s32.totalorder %s19, 0
    %p54 = por %p52, %p53
    %p55 = scmp.ne.s32.totalorder %s41, %s42
    %p56 = scmp.eq.s32.totalorder %s20, 1
    %p57 = por %p55, %p56
    %p59 = scmp.ne.s32.totalorder %s42, %s58
    %p60 = scmp.eq.s32.totalorder %s20, 0
    %p61 = por %p59, %p60
    %s63 = sadd.s32 %s62, 1
    %p66 = scmp.eq.s32.totalorder %s14, 1
    %p67 = scmp.ne.s32.totalorder %s62, %s64
    %p68 = scmp.eq.s32.totalorder %s14, 0
    %p69 = por %p67, %p68
    %p70 = scmp.ne.s32.totalorder %s62, %s64
    %p71 = scmp.eq.s32.totalorder %s19, 1
    %p72 = por %p70, %p71
    %p73 = scmp.ne.s32.totalorder %s64, %s65
    %p74 = scmp.eq.s32.totalorder %s19, 0
    %p75 = por %p73, %p74
    %p76 = scmp.ne.s32.totalorder %s64, %s65
    %p77 = scmp.eq.s32.totalorder %s20, 1
    %p78 = por %p76, %p77
    %p80 = scmp.ne.s32.totalorder %s65, %s79
    %p81 = scmp.eq.s32.totalorder %s20, 0
    %p82 = por %p80, %p81
    %s84 = sadd.s32 %s83, 1
    %p87 = scmp.eq.s32.totalorder %s14, 1
    %p88 = scmp.ne.s32.totalorder %s83, %s85
    %p89 = scmp.eq.s32.totalorder %s14, 0
    %p90 = por %p88, %p89
    %p91 = scmp.ne.s32.totalorder %s83, %s85
    %p92 = scmp.eq.s32.totalorder %s19, 1
    %p93 = por %p91, %p92
    %p94 = scmp.ne.s32.totalorder %s85, %s86
    %p95 = scmp.eq.s32.totalorder %s19, 0
    %p96 = por %p94, %p95
    %p97 = scmp.ne.s32.totalorder %s85, %s86
    %p98 = scmp.eq.s32.totalorder %s20, 1
    %p99 = por %p97, %p98
    %p101 = scmp.ne.s32.totalorder %s86, %s100
    %p102 = scmp.eq.s32.totalorder %s20, 0
    %p103 = por %p101, %p102
    %s105 = sadd.s32 %s104, 1
    %p108 = scmp.eq.s32.totalorder %s14, 1
    %p109 = scmp.ne.s32.totalorder %s104, %s106
    %p110 = scmp.eq.s32.totalorder %s14, 0
    %p111 = por %p109, %p110
    %p112 = scmp.ne.s32.totalorder %s104, %s106
    %p113 = scmp.eq.s32.totalorder %s19, 1
    %p114 = por %p112, %p113
    %p115 = scmp.ne.s32.totalorder %s106, %s107
    %p116 = scmp.eq.s32.totalorder %s19, 0
    %p117 = por %p115, %p116
    %p118 = scmp.ne.s32.totalorder %s106, %s107
    %p119 = scmp.eq.s32.totalorder %s20, 1
    %p120 = por %p118, %p119
    %p122 = scmp.ne.s32.totalorder %s107, %s121
    %p123 = scmp.eq.s32.totalorder %s20, 0
    %p124 = por %p122, %p123
    %s126 = sadd.s32 %s125, 1
    %p129 = scmp.eq.s32.totalorder %s14, 1
    %p130 = scmp.ne.s32.totalorder %s125, %s127
    %p131 = scmp.eq.s32.totalorder %s14, 0
    %p132 = por %p130, %p131
    %p133 = scmp.ne.s32.totalorder %s125, %s127
    %p134 = scmp.eq.s32.totalorder %s19, 1
    %p135 = por %p133, %p134
    %p136 = scmp.ne.s32.totalorder %s127, %s128
    %p137 = scmp.eq.s32.totalorder %s19, 0
    %p138 = por %p136, %p137
    %p139 = scmp.ne.s32.totalorder %s127, %s128
    %p140 = scmp.eq.s32.totalorder %s20, 1
    %p141 = por %p139, %p140
    %p143 = scmp.ne.s32.totalorder %s128, %s142
    %p144 = scmp.eq.s32.totalorder %s20, 0
    %p145 = por %p143, %p144
    %s147 = sadd.s32 %s146, 1
    %p150 = scmp.eq.s32.totalorder %s14, 1
    %p151 = scmp.ne.s32.totalorder %s146, %s148
    %p152 = scmp.eq.s32.totalorder %s14, 0
    %p153 = por %p151, %p152
    %p154 = scmp.ne.s32.totalorder %s146, %s148
    %p155 = scmp.eq.s32.totalorder %s19, 1
    %p156 = por %p154, %p155
    %p157 = scmp.ne.s32.totalorder %s148, %s149
    %p158 = scmp.eq.s32.totalorder %s19, 0
    %p159 = por %p157, %p158
    %p160 = scmp.ne.s32.totalorder %s148, %s149
    %p161 = scmp.eq.s32.totalorder %s20, 1
    %p162 = por %p160, %p161
    %p164 = scmp.ne.s32.totalorder %s149, %s163
    %p165 = scmp.eq.s32.totalorder %s20, 0
    %p166 = por %p164, %p165
    %s167 = ssub.s32 %s21, %s33
    %p168 = scmp.eq.s32.totalorder %s167, 0
    %s170 = sadd.s32 %s169, 1
    %s171 = scalar_select %p168, %s169, %s170
    %p174 = pneg %p168
    %p175 = scmp.eq.s32.totalorder %s14, 1
    %p176 = por %p174, %p175
    %p177 = scmp.ne.s32.totalorder %s169, %s172
    %p178 = scmp.eq.s32.totalorder %s14, 0
    %p179 = por %p177, %p178
    %p180 = scmp.ne.s32.totalorder %s169, %s172
    %p181 = scmp.eq.s32.totalorder %s19, 1
    %p182 = por %p180, %p181
    %p183 = scmp.ne.s32.totalorder %s172, %s173
    %p184 = scmp.eq.s32.totalorder %s19, 0
    %p185 = por %p183, %p184
    %p186 = scmp.ne.s32.totalorder %s172, %s173
    %p187 = scmp.eq.s32.totalorder %s20, 1
    %p188 = por %p186, %p187
    %p190 = scmp.ne.s32.totalorder %s173, %s189
    %p191 = scmp.eq.s32.totalorder %s20, 0
    %p192 = por %p190, %p191
    %p193 = scmp.le.s32.totalorder 1, %s14
    %p194 = scmp.lt.s32.totalorder %s14, 3
    %p195 = pnand %p193, %p194
    %p196 = pneg %p195
    // Predicated region
    $region9: #{lstm_speedup_predictor.3} parent=5 // pred_check
      _
    $region10: #{lstm_speedup_predictor.3} parent=5 // pred_check_branch
      %198 = sbr.rel (%p195) target = $region12
    $region11: #{lstm_speedup_predictor.3} parent=5 // pred_region
      %s199 = ssub.s32 %s14, 1
      // Predicated region
      $region13: #{lstm_speedup_predictor.3} parent=11 // pred_check
        %p200 = pneg %p75
      $region14: #{lstm_speedup_predictor.3} parent=11 // pred_check_branch
        %202 = sbr.rel (%p200) target = $region16
      $region15: #{lstm_speedup_predictor.3} parent=11 // pred_region
        _
      $region16: #{lstm_speedup_predictor.3} parent=11 // pred_fallthru
        _
      // Predicated region
      $region17: #{lstm_speedup_predictor.3} parent=11 // pred_check
        %p203 = pneg %p96
      $region18: #{lstm_speedup_predictor.3} parent=11 // pred_check_branch
        %205 = sbr.rel (%p203) target = $region20
      $region19: #{lstm_speedup_predictor.3} parent=11 // pred_region
        _
      $region20: #{lstm_speedup_predictor.3} parent=11 // pred_fallthru
        _
      // Predicated region
      $region21: #{lstm_speedup_predictor.3} parent=11 // pred_check
        %p206 = pneg %p117
      $region22: #{lstm_speedup_predictor.3} parent=11 // pred_check_branch
        %208 = sbr.rel (%p206) target = $region24
      $region23: #{lstm_speedup_predictor.3} parent=11 // pred_region
        _
      $region24: #{lstm_speedup_predictor.3} parent=11 // pred_fallthru
        _
      // Predicated region
      $region25: #{lstm_speedup_predictor.3} parent=11 // pred_check
        %p209 = pneg %p138
      $region26: #{lstm_speedup_predictor.3} parent=11 // pred_check_branch
        %211 = sbr.rel (%p209) target = $region28
      $region27: #{lstm_speedup_predictor.3} parent=11 // pred_region
        _
      $region28: #{lstm_speedup_predictor.3} parent=11 // pred_fallthru
        _
      // Predicated region
      $region29: #{lstm_speedup_predictor.3} parent=11 // pred_check
        %p212 = pneg %p159
      $region30: #{lstm_speedup_predictor.3} parent=11 // pred_check_branch
        %214 = sbr.rel (%p212) target = $region32
      $region31: #{lstm_speedup_predictor.3} parent=11 // pred_region
        _
      $region32: #{lstm_speedup_predictor.3} parent=11 // pred_fallthru
        _
    $region12: #{lstm_speedup_predictor.3} parent=5 // pred_fallthru
      _
    %p215 = scmp.lt.s32.totalorder %s14, 2
    // Predicated region
    $region33: #{lstm_speedup_predictor.3} parent=5 // pred_check
      %p216 = pneg %p215
    $region34: #{lstm_speedup_predictor.3} parent=5 // pred_check_branch
      %218 = sbr.rel (%p216) target = $region36
    $region35: #{lstm_speedup_predictor.3} parent=5 // pred_region
      // Predicated region
      $region37: #{lstm_speedup_predictor.3} parent=35 // pred_check
        %p219 = pneg %p48
      $region38: #{lstm_speedup_predictor.3} parent=35 // pred_check_branch
        %221 = sbr.rel (%p219) target = $region40
      $region39: #{lstm_speedup_predictor.3} parent=35 // pred_region
        %s222 = smul.u32 4, %s22
        %p223 = scmp.lt.s32.totalorder %s222, 7
        %s224 = scalar_select %p223, %s222, 7
        %p225 = scmp.lt.s32.totalorder %s21, 0
        %s226 = scalar_select %p225, %s21, 0
        %s227 = sadd.s32 %s226, %s224
        %s228 = smul.addr %s227, 8
        %s229 = scalar_lea.vmem %s0, %s228
        %s230 = smul.u32 4, %s22
      $region40: #{lstm_speedup_predictor.3} parent=35 // pred_fallthru
        _
    $region36: #{lstm_speedup_predictor.3} parent=5 // pred_fallthru
      _
    %p231 = scmp.le.s32.totalorder 1, %s14
    %p232 = scmp.lt.s32.totalorder %s14, 3
    %p233 = pnand %p231, %p232
    %p234 = pneg %p233
    // Predicated region
    $region41: #{lstm_speedup_predictor.3} parent=5 // pred_check
      _
    $region42: #{lstm_speedup_predictor.3} parent=5 // pred_check_branch
      %236 = sbr.rel (%p233) target = $region44
    $region43: #{lstm_speedup_predictor.3} parent=5 // pred_region
      %s237 = ssub.s32 %s14, 1
      %s238 = smul.u32 4, %s24
      %p239 = scmp.lt.s32.totalorder %s238, 7
      %s240 = scalar_select %p239, %s238, 7
      %p241 = scmp.lt.s32.totalorder %s23, 0
      %s242 = scalar_select %p241, %s23, 0
      %s243 = sadd.s32 %s242, %s240
      %s244 = smul.addr %s243, 8
      %s245 = scalar_lea.vmem %s0, %s244
      %p246 = pneg %p54
      %p247 = pneg %p51
      %p248 = pneg %p75
      %p249 = pneg %p72
      %p250 = pneg %p96
      %p251 = pneg %p93
      %p252 = pneg %p117
      %p253 = pneg %p114
      %p254 = pneg %p138
      %p255 = pneg %p135
      %p256 = pneg %p159
      %p257 = pneg %p156
      %p258 = pneg %p185
      %p259 = pneg %p182
      %p260 = scmp.lt.s32.totalorder %s23, 0
      %s261 = scalar_select %p260, %s23, 0
      %s262 = smul.addr %s261, 8
      %s263 = scalar_lea.vmem %s6, %s262
      %s264 = smul.u32 4, %s24
      %p265 = scmp.lt.s32.totalorder %s264, 7
      %s266 = scalar_select %p265, %s264, 7
      %p267 = scmp.lt.s32.totalorder %s23, 0
      %s268 = scalar_select %p267, %s23, 0
      %s269 = sadd.s32 %s268, %s266
      %s270 = smul.addr %s269, 8
      %s271 = scalar_lea.vmem %s0, %s270
      %s272 = smul.u32 4, %s24
      %p273 = scmp.lt.s32.totalorder %s23, 0
      %s274 = scalar_select %p273, %s23, 0
      %s275 = smul.addr %s274, 8
      %s276 = scalar_lea.vmem %s6, %s275
      %p277 = scmp.eq.s32.totalorder %s24, 0
      // Predicated region
      $region45: #{lstm_speedup_predictor.3} parent=43 // pred_check
        %p278 = pneg %p277
      $region46: #{lstm_speedup_predictor.3} parent=43 // pred_check_branch
        %280 = sbr.rel (%p278) target = $region48
      $region47: #{lstm_speedup_predictor.3} parent=43 // pred_region
        %vm281 = vcmask 261120
        %282 = vst.msk [vmem:[#allocation2] sm:$0xff] %vm281, 0.0
        %283 = vst.msk [vmem:[#allocation3] sm:$0xff] %vm281, 0.0
      $region48: #{lstm_speedup_predictor.3} parent=43 // pred_fallthru
        _
      %v284 = vld [vmem:[%s271] sm:$0xff]
      %v285 = vld [vmem:[%s271 + $0x8] sm:$0xff]
      %v286 = vld [vmem:[%s271 + $0x10] sm:$0xff]
      %v287 = vld [vmem:[%s271 + $0x18] sm:$0xff]
      %v288 = vld [vmem:[%s1] sm:$0xff]
      %v289 = vld [vmem:[%s1 + $0x8] sm:$0xff]
      %v290 = vld [vmem:[%s1 + $0x10] sm:$0xff]
      %v291 = vld [vmem:[%s1 + $0x18] sm:$0xff]
      %v292 = vld [vmem:[%s3] sm:$0x1]
      %v294 = vlaneseq
      %v295 = vshrl.u32 %v294, 7
      %v296 = vsub.s32 0, %v295
      %v297 = vrot.slane %v292, %v296
      %vm299 = vcmask 261120
      %v301 = vsel %vm299, %v284, 0
      %v304 = vsel %vm299, %v285, 0
      %v307 = vsel %vm299, %v286, 0
      %v310 = vsel %vm299, %v287, 0
      %312 = vmatprep.subr.mxu0 0.0
      %313 = vmatpush1.msra.mxu0 %v288
      %314 = vmatprep.subr.mxu0 0.0
      %315 = vmatpush1.msra.mxu0 %v289
      %316 = vmatprep.subr.mxu0 0.0
      %317 = vmatpush1.msra.mxu0 %v290
      %318 = vmatprep.subr.mxu0 0.0
      %319 = vmatpush1.msra.mxu0 %v291
      %320 = vmatprep.subr.mxu0 0.0
      %321 = vmatpush1.msra.mxu0 0.0
      %322 = vmatprep.subr.mxu0 0.0
      %323 = vmatpush1.msra.mxu0 0.0
      %324 = vmatprep.subr.mxu0 0.0
      %325 = vmatpush1.msra.mxu0 0.0
      %326 = vmatprep.subr.mxu0 0.0
      %327 = vmatpush1.msra.mxu0 0.0
      %328 = vmatprep.subr.mxu0 0.0
      %329 = vmatpush1.msra.mxu0 0.0
      %330 = vmatprep.subr.mxu0 0.0
      %331 = vmatpush1.msra.mxu0 0.0
      %332 = vmatprep.subr.mxu0 0.0
      %333 = vmatpush1.msra.mxu0 0.0
      %334 = vmatprep.subr.mxu0 0.0
      %335 = vmatpush1.msra.mxu0 0.0
      %336 = vmatprep.subr.mxu0 0.0
      %337 = vmatpush1.msra.mxu0 0.0
      %338 = vmatprep.subr.mxu0 0.0
      %339 = vmatpush1.msra.mxu0 0.0
      %340 = vmatprep.subr.mxu0 0.0
      %341 = vmatpush1.msra.mxu0 0.0
      %342 = vmatprep.subr.mxu0 0.0
      %343 = vmatpush1.msra.mxu0 0.0
      %344 = vmatprep.subr.mxu0 0.0
      %345 = vmatpush1.msra.mxu0 0.0
      %346 = vmatprep.subr.mxu0 0.0
      %347 = vmatpush1.msra.mxu0 0.0
      %348 = vmatprep.subr.mxu0 0.0
      %349 = vmatpush1.msra.mxu0 0.0
      %350 = vmatprep.subr.mxu0 0.0
      %351 = vmatpush1.msra.mxu0 0.0
      %352 = vmatprep.subr.mxu0 0.0
      %353 = vmatpush1.msra.mxu0 0.0
      %354 = vmatprep.subr.mxu0 0.0
      %355 = vmatpush1.msra.mxu0 0.0
      %356 = vmatprep.subr.mxu0 0.0
      %357 = vmatpush1.msra.mxu0 0.0
      %358 = vmatprep.subr.mxu0 0.0
      %359 = vmatpush1.msra.mxu0 0.0
      %360 = vmatprep.subr.mxu0 0.0
      %361 = vmatpush1.msra.mxu0 0.0
      %362 = vmatprep.subr.mxu0 0.0
      %363 = vmatpush1.msra.mxu0 0.0
      %364 = vmatprep.subr.mxu0 0.0
      %365 = vmatpush1.msra.mxu0 0.0
      %366 = vmatprep.subr.mxu0 0.0
      %367 = vmatpush1.msra.mxu0 0.0
      %368 = vmatprep.subr.mxu0 0.0
      %369 = vmatpush1.msra.mxu0 0.0
      %370 = vmatprep.subr.mxu0 0.0
      %371 = vmatpush1.msra.mxu0 0.0
      %372 = vmatprep.subr.mxu0 0.0
      %373 = vmatpush1.msra.mxu0 0.0
      %374 = vmatprep.subr.mxu0 0.0
      %375 = vmatpush1.msra.mxu0 0.0
      %376 = vmatprep.mubr.f32.mxu0 0.0
      %377 = vmatmul.mubr.f32.gmra.mrb[0].mxu0 %v301
      %v378 = vpop.f32.mrb[0].mxu0
      %v379 = vadd.f32 %v297, %v378
      %v380 = vpop.f32.mrb[0].mxu0
      %381 = vmatprep.mubr.f32.mxu0 0.0
      %382 = vmatmul.mubr.f32.gmra.mrb[0].mxu0 %v304
      %v383 = vpop.f32.mrb[0].mxu0
      %v384 = vadd.f32 %v297, %v383
      %v385 = vpop.f32.mrb[0].mxu0
      %386 = vmatprep.mubr.f32.mxu0 0.0
      %387 = vmatmul.mubr.f32.gmra.mrb[0].mxu0 %v307
      %v388 = vpop.f32.mrb[0].mxu0
      %v389 = vadd.f32 %v297, %v388
      %v390 = vpop.f32.mrb[0].mxu0
      %391 = vmatprep.mubr.f32.mxu0 0.0
      %392 = vmatmul.mubr.f32.gmra.mrb[0].mxu0 %v310
      %v393 = vpop.f32.mrb[0].mxu0
      %v394 = vadd.f32 %v297, %v393
      %v395 = vpop.f32.mrb[0].mxu0
      %396 = vdwg.mxu0
      %397 = vst [vmem:[#allocation4] sm:$0xff] %v379
      %398 = vst [vmem:[#allocation4 + $0x8] sm:$0xff] %v384
      %399 = vst [vmem:[#allocation4 + $0x10] sm:$0xff] %v389
      %400 = vst [vmem:[#allocation4 + $0x18] sm:$0xff] %v394
      %v401 = vld [vmem:[%s2] sm:$0xff]
      %v402 = vld [vmem:[%s2 + $0x8] sm:$0xff]
      %v403 = vld [vmem:[%s2 + $0x10] sm:$0xff]
      %v404 = vld [vmem:[%s2 + $0x18] sm:$0xff]
      %v405 = vlaneseq
      %v406 = vand.u32 %v405, 127
      %vm407 = vcmp.ge.s32.totalorder %v406, 64
      %vm408 = vcmp.lt.s32.totalorder %v406, 96
      %vm409 = vmand %vm407, %vm408
      %v410 = vsel %vm409, 1.0, 0.5
      %v411 = vsel %vm409, 0.0, 0.5
      %v412 = vld [vmem:[#allocation2] sm:$0xff]
      %v413 = vld [vmem:[#allocation3] sm:$0xff]
      %v414 = vld [vmem:[#allocation4] sm:$0xff]
      %v416 = vsel %vm299, %v412, 0
      %418 = vmatprep.subr.mxu0 0.0
      %419 = vmatpush1.msra.mxu0 %v401
      %420 = vmatprep.subr.mxu0 0.0
      %421 = vmatpush1.msra.mxu0 %v402
      %422 = vmatprep.subr.mxu0 0.0
      %423 = vmatpush1.msra.mxu0 %v403
      %424 = vmatprep.subr.mxu0 0.0
      %425 = vmatpush1.msra.mxu0 %v404
      %426 = vmatprep.subr.mxu0 0.0
      %427 = vmatpush1.msra.mxu0 0.0
      %428 = vmatprep.subr.mxu0 0.0
      %429 = vmatpush1.msra.mxu0 0.0
      %430 = vmatprep.subr.mxu0 0.0
      %431 = vmatpush1.msra.mxu0 0.0
      %432 = vmatprep.subr.mxu0 0.0
      %433 = vmatpush1.msra.mxu0 0.0
      %434 = vmatprep.subr.mxu0 0.0
      %435 = vmatpush1.msra.mxu0 0.0
      %436 = vmatprep.subr.mxu0 0.0
      %437 = vmatpush1.msra.mxu0 0.0
      %438 = vmatprep.subr.mxu0 0.0
      %439 = vmatpush1.msra.mxu0 0.0
      %440 = vmatprep.subr.mxu0 0.0
      %441 = vmatpush1.msra.mxu0 0.0
      %442 = vmatprep.subr.mxu0 0.0
      %443 = vmatpush1.msra.mxu0 0.0
      %444 = vmatprep.subr.mxu0 0.0
      %445 = vmatpush1.msra.mxu0 0.0
      %446 = vmatprep.subr.mxu0 0.0
      %447 = vmatpush1.msra.mxu0 0.0
      %448 = vmatprep.subr.mxu0 0.0
      %449 = vmatpush1.msra.mxu0 0.0
      %450 = vmatprep.subr.mxu0 0.0
      %451 = vmatpush1.msra.mxu0 0.0
      %452 = vmatprep.subr.mxu0 0.0
      %453 = vmatpush1.msra.mxu0 0.0
      %454 = vmatprep.subr.mxu0 0.0
      %455 = vmatpush1.msra.mxu0 0.0
      %456 = vmatprep.subr.mxu0 0.0
      %457 = vmatpush1.msra.mxu0 0.0
      %458 = vmatprep.subr.mxu0 0.0
      %459 = vmatpush1.msra.mxu0 0.0
      %460 = vmatprep.subr.mxu0 0.0
      %461 = vmatpush1.msra.mxu0 0.0
      %462 = vmatprep.subr.mxu0 0.0
      %463 = vmatpush1.msra.mxu0 0.0
      %464 = vmatprep.subr.mxu0 0.0
      %465 = vmatpush1.msra.mxu0 0.0
      %466 = vmatprep.subr.mxu0 0.0
      %467 = vmatpush1.msra.mxu0 0.0
      %468 = vmatprep.subr.mxu0 0.0
      %469 = vmatpush1.msra.mxu0 0.0
      %470 = vmatprep.subr.mxu0 0.0
      %471 = vmatpush1.msra.mxu0 0.0
      %472 = vmatprep.subr.mxu0 0.0
      %473 = vmatpush1.msra.mxu0 0.0
      %474 = vmatprep.subr.mxu0 0.0
      %475 = vmatpush1.msra.mxu0 0.0
      %476 = vmatprep.subr.mxu0 0.0
      %477 = vmatpush1.msra.mxu0 0.0
      %478 = vmatprep.subr.mxu0 0.0
      %479 = vmatpush1.msra.mxu0 0.0
      %480 = vmatprep.subr.mxu0 0.0
      %481 = vmatpush1.msra.mxu0 0.0
      %482 = vmatprep.mubr.f32.mxu0 0.0
      %483 = vmatmul.mubr.f32.gmra.mrb[0].mxu0 %v416
      %v484 = vpop.f32.mrb[0].mxu0
      %v485 = vadd.f32 0.0, %v484
      %v486 = vpop.f32.mrb[0].mxu0
      %487 = vdwg.mxu0
      %v488 = vadd.f32 %v414, %v485
      %v489 = vmul.f32 %v488, %v410
      %v490 = vtanh.pop %v489
      %v491 = vmul.f32 %v490, %v410
      %v492 = vadd.f32 %v491, %v411
      %494 = vrot.lane.b32.xlu0 %v413, 32
      %v495 = vpop.permute.xlu0 %494
      %v497 = vmul.f32 %v492, %v495
      %499 = vrot.lane.b32.xlu0 %v492, 64
      %v500 = vpop.permute.xlu0 %499
      %v502 = vmul.f32 %v492, %v500
      %504 = vrot.lane.b32.xlu0 %v502, 32
      %v505 = vpop.permute.xlu0 %504
      %v507 = vadd.f32 %v497, %v505
      %v508 = vtanh.pop %v507
      %510 = vrot.lane.b32.xlu0 %v508, 64
      %v511 = vpop.permute.xlu0 %510
      %v513 = vmul.f32 %v492, %v511
      %515 = vrot.lane.b32.xlu0 %v513, 32
      %v516 = vpop.permute.xlu0 %515
      %518 = vst.msk [vmem:[#allocation2] sm:$0xff] %vm299, %v516
      %520 = vrot.lane.b32.xlu0 %v507, 96
      %v521 = vpop.permute.xlu0 %520
      %523 = vst.msk [vmem:[#allocation3] sm:$0xff] %vm299, %v521
      %v524 = vld [vmem:[#allocation2] sm:$0xff]
      %v525 = vld [vmem:[#allocation3] sm:$0xff]
      %s526 = scalar_lea.vmem [#allocation4], 8
      %v527 = vld [vmem:[%s526] sm:$0xff]
      %v529 = vsel %vm299, %v524, 0
      %531 = vmatprep.subr.mxu0 0.0
      %532 = vmatpush1.msra.mxu0 %v401
      %533 = vmatprep.subr.mxu0 0.0
      %534 = vmatpush1.msra.mxu0 %v402
      %535 = vmatprep.subr.mxu0 0.0
      %536 = vmatpush1.msra.mxu0 %v403
      %537 = vmatprep.subr.mxu0 0.0
      %538 = vmatpush1.msra.mxu0 %v404
      %539 = vmatprep.subr.mxu0 0.0
      %540 = vmatpush1.msra.mxu0 0.0
      %541 = vmatprep.subr.mxu0 0.0
      %542 = vmatpush1.msra.mxu0 0.0
      %543 = vmatprep.subr.mxu0 0.0
      %544 = vmatpush1.msra.mxu0 0.0
      %545 = vmatprep.subr.mxu0 0.0
      %546 = vmatpush1.msra.mxu0 0.0
      %547 = vmatprep.subr.mxu0 0.0
      %548 = vmatpush1.msra.mxu0 0.0
      %549 = vmatprep.subr.mxu0 0.0
      %550 = vmatpush1.msra.mxu0 0.0
      %551 = vmatprep.subr.mxu0 0.0
      %552 = vmatpush1.msra.mxu0 0.0
      %553 = vmatprep.subr.mxu0 0.0
      %554 = vmatpush1.msra.mxu0 0.0
      %555 = vmatprep.subr.mxu0 0.0
      %556 = vmatpush1.msra.mxu0 0.0
      %557 = vmatprep.subr.mxu0 0.0
      %558 = vmatpush1.msra.mxu0 0.0
      %559 = vmatprep.subr.mxu0 0.0
      %560 = vmatpush1.msra.mxu0 0.0
      %561 = vmatprep.subr.mxu0 0.0
      %562 = vmatpush1.msra.mxu0 0.0
      %563 = vmatprep.subr.mxu0 0.0
      %564 = vmatpush1.msra.mxu0 0.0
      %565 = vmatprep.subr.mxu0 0.0
      %566 = vmatpush1.msra.mxu0 0.0
      %567 = vmatprep.subr.mxu0 0.0
      %568 = vmatpush1.msra.mxu0 0.0
      %569 = vmatprep.subr.mxu0 0.0
      %570 = vmatpush1.msra.mxu0 0.0
      %571 = vmatprep.subr.mxu0 0.0
      %572 = vmatpush1.msra.mxu0 0.0
      %573 = vmatprep.subr.mxu0 0.0
      %574 = vmatpush1.msra.mxu0 0.0
      %575 = vmatprep.subr.mxu0 0.0
      %576 = vmatpush1.msra.mxu0 0.0
      %577 = vmatprep.subr.mxu0 0.0
      %578 = vmatpush1.msra.mxu0 0.0
      %579 = vmatprep.subr.mxu0 0.0
      %580 = vmatpush1.msra.mxu0 0.0
      %581 = vmatprep.subr.mxu0 0.0
      %582 = vmatpush1.msra.mxu0 0.0
      %583 = vmatprep.subr.mxu0 0.0
      %584 = vmatpush1.msra.mxu0 0.0
      %585 = vmatprep.subr.mxu0 0.0
      %586 = vmatpush1.msra.mxu0 0.0
      %587 = vmatprep.subr.mxu0 0.0
      %588 = vmatpush1.msra.mxu0 0.0
      %589 = vmatprep.subr.mxu0 0.0
      %590 = vmatpush1.msra.mxu0 0.0
      %591 = vmatprep.subr.mxu0 0.0
      %592 = vmatpush1.msra.mxu0 0.0
      %593 = vmatprep.subr.mxu0 0.0
      %594 = vmatpush1.msra.mxu0 0.0
      %595 = vmatprep.mubr.f32.mxu0 0.0
      %596 = vmatmul.mubr.f32.gmra.mrb[0].mxu0 %v529
      %v597 = vpop.f32.mrb[0].mxu0
      %v598 = vadd.f32 0.0, %v597
      %v599 = vpop.f32.mrb[0].mxu0
      %600 = vdwg.mxu0
      %v601 = vadd.f32 %v527, %v598
      %v602 = vmul.f32 %v601, %v410
      %v603 = vtanh.pop %v602
      %v604 = vmul.f32 %v603, %v410
      %v605 = vadd.f32 %v604, %v411
      %607 = vrot.lane.b32.xlu0 %v525, 32
      %v608 = vpop.permute.xlu0 %607
      %v610 = vmul.f32 %v605, %v608
      %612 = vrot.lane.b32.xlu0 %v605, 64
      %v613 = vpop.permute.xlu0 %612
      %v615 = vmul.f32 %v605, %v613
      %617 = vrot.lane.b32.xlu0 %v615, 32
      %v618 = vpop.permute.xlu0 %617
      %v620 = vadd.f32 %v610, %v618
      %v621 = vtanh.pop %v620
      %623 = vrot.lane.b32.xlu0 %v621, 64
      %v624 = vpop.permute.xlu0 %623
      %v626 = vmul.f32 %v605, %v624
      %628 = vrot.lane.b32.xlu0 %v626, 32
      %v629 = vpop.permute.xlu0 %628
      %631 = vst.msk [vmem:[#allocation2] sm:$0xff] %vm299, %v629
      %633 = vrot.lane.b32.xlu0 %v620, 96
      %v634 = vpop.permute.xlu0 %633
      %636 = vst.msk [vmem:[#allocation3] sm:$0xff] %vm299, %v634
      %v637 = vld [vmem:[#allocation2] sm:$0xff]
      %v638 = vld [vmem:[#allocation3] sm:$0xff]
      %s639 = scalar_lea.vmem [#allocation4], 16
      %v640 = vld [vmem:[%s639] sm:$0xff]
      %v642 = vsel %vm299, %v637, 0
      %644 = vmatprep.subr.mxu0 0.0
      %645 = vmatpush1.msra.mxu0 %v401
      %646 = vmatprep.subr.mxu0 0.0
      %647 = vmatpush1.msra.mxu0 %v402
      %648 = vmatprep.subr.mxu0 0.0
      %649 = vmatpush1.msra.mxu0 %v403
      %650 = vmatprep.subr.mxu0 0.0
      %651 = vmatpush1.msra.mxu0 %v404
      %652 = vmatprep.subr.mxu0 0.0
      %653 = vmatpush1.msra.mxu0 0.0
      %654 = vmatprep.subr.mxu0 0.0
      %655 = vmatpush1.msra.mxu0 0.0
      %656 = vmatprep.subr.mxu0 0.0
      %657 = vmatpush1.msra.mxu0 0.0
      %658 = vmatprep.subr.mxu0 0.0
      %659 = vmatpush1.msra.mxu0 0.0
      %660 = vmatprep.subr.mxu0 0.0
      %661 = vmatpush1.msra.mxu0 0.0
      %662 = vmatprep.subr.mxu0 0.0
      %663 = vmatpush1.msra.mxu0 0.0
      %664 = vmatprep.subr.mxu0 0.0
      %665 = vmatpush1.msra.mxu0 0.0
      %666 = vmatprep.subr.mxu0 0.0
      %667 = vmatpush1.msra.mxu0 0.0
      %668 = vmatprep.subr.mxu0 0.0
      %669 = vmatpush1.msra.mxu0 0.0
      %670 = vmatprep.subr.mxu0 0.0
      %671 = vmatpush1.msra.mxu0 0.0
      %672 = vmatprep.subr.mxu0 0.0
      %673 = vmatpush1.msra.mxu0 0.0
      %674 = vmatprep.subr.mxu0 0.0
      %675 = vmatpush1.msra.mxu0 0.0
      %676 = vmatprep.subr.mxu0 0.0
      %677 = vmatpush1.msra.mxu0 0.0
      %678 = vmatprep.subr.mxu0 0.0
      %679 = vmatpush1.msra.mxu0 0.0
      %680 = vmatprep.subr.mxu0 0.0
      %681 = vmatpush1.msra.mxu0 0.0
      %682 = vmatprep.subr.mxu0 0.0
      %683 = vmatpush1.msra.mxu0 0.0
      %684 = vmatprep.subr.mxu0 0.0
      %685 = vmatpush1.msra.mxu0 0.0
      %686 = vmatprep.subr.mxu0 0.0
      %687 = vmatpush1.msra.mxu0 0.0
      %688 = vmatprep.subr.mxu0 0.0
      %689 = vmatpush1.msra.mxu0 0.0
      %690 = vmatprep.subr.mxu0 0.0
      %691 = vmatpush1.msra.mxu0 0.0
      %692 = vmatprep.subr.mxu0 0.0
      %693 = vmatpush1.msra.mxu0 0.0
      %694 = vmatprep.subr.mxu0 0.0
      %695 = vmatpush1.msra.mxu0 0.0
      %696 = vmatprep.subr.mxu0 0.0
      %697 = vmatpush1.msra.mxu0 0.0
      %698 = vmatprep.subr.mxu0 0.0
      %699 = vmatpush1.msra.mxu0 0.0
      %700 = vmatprep.subr.mxu0 0.0
      %701 = vmatpush1.msra.mxu0 0.0
      %702 = vmatprep.subr.mxu0 0.0
      %703 = vmatpush1.msra.mxu0 0.0
      %704 = vmatprep.subr.mxu0 0.0
      %705 = vmatpush1.msra.mxu0 0.0
      %706 = vmatprep.subr.mxu0 0.0
      %707 = vmatpush1.msra.mxu0 0.0
      %708 = vmatprep.mubr.f32.mxu0 0.0
      %709 = vmatmul.mubr.f32.gmra.mrb[0].mxu0 %v642
      %v710 = vpop.f32.mrb[0].mxu0
      %v711 = vadd.f32 0.0, %v710
      %v712 = vpop.f32.mrb[0].mxu0
      %713 = vdwg.mxu0
      %v714 = vadd.f32 %v640, %v711
      %v715 = vmul.f32 %v714, %v410
      %v716 = vtanh.pop %v715
      %v717 = vmul.f32 %v716, %v410
      %v718 = vadd.f32 %v717, %v411
      %720 = vrot.lane.b32.xlu0 %v638, 32
      %v721 = vpop.permute.xlu0 %720
      %v723 = vmul.f32 %v718, %v721
      %725 = vrot.lane.b32.xlu0 %v718, 64
      %v726 = vpop.permute.xlu0 %725
      %v728 = vmul.f32 %v718, %v726
      %730 = vrot.lane.b32.xlu0 %v728, 32
      %v731 = vpop.permute.xlu0 %730
      %v733 = vadd.f32 %v723, %v731
      %v734 = vtanh.pop %v733
      %736 = vrot.lane.b32.xlu0 %v734, 64
      %v737 = vpop.permute.xlu0 %736
      %v739 = vmul.f32 %v718, %v737
      %741 = vrot.lane.b32.xlu0 %v739, 32
      %v742 = vpop.permute.xlu0 %741
      %744 = vst.msk [vmem:[#allocation2] sm:$0xff] %vm299, %v742
      %746 = vrot.lane.b32.xlu0 %v733, 96
      %v747 = vpop.permute.xlu0 %746
      %749 = vst.msk [vmem:[#allocation3] sm:$0xff] %vm299, %v747
      %v750 = vld [vmem:[#allocation2] sm:$0xff]
      %v751 = vld [vmem:[#allocation3] sm:$0xff]
      %s752 = scalar_lea.vmem [#allocation4], 24
      %v753 = vld [vmem:[%s752] sm:$0xff]
      %v755 = vsel %vm299, %v750, 0
      %757 = vmatprep.subr.mxu0 0.0
      %758 = vmatpush1.msra.mxu0 %v401
      %759 = vmatprep.subr.mxu0 0.0
      %760 = vmatpush1.msra.mxu0 %v402
      %761 = vmatprep.subr.mxu0 0.0
      %762 = vmatpush1.msra.mxu0 %v403
      %763 = vmatprep.subr.mxu0 0.0
      %764 = vmatpush1.msra.mxu0 %v404
      %765 = vmatprep.subr.mxu0 0.0
      %766 = vmatpush1.msra.mxu0 0.0
      %767 = vmatprep.subr.mxu0 0.0
      %768 = vmatpush1.msra.mxu0 0.0
      %769 = vmatprep.subr.mxu0 0.0
      %770 = vmatpush1.msra.mxu0 0.0
      %771 = vmatprep.subr.mxu0 0.0
      %772 = vmatpush1.msra.mxu0 0.0
      %773 = vmatprep.subr.mxu0 0.0
      %774 = vmatpush1.msra.mxu0 0.0
      %775 = vmatprep.subr.mxu0 0.0
      %776 = vmatpush1.msra.mxu0 0.0
      %777 = vmatprep.subr.mxu0 0.0
      %778 = vmatpush1.msra.mxu0 0.0
      %779 = vmatprep.subr.mxu0 0.0
      %780 = vmatpush1.msra.mxu0 0.0
      %781 = vmatprep.subr.mxu0 0.0
      %782 = vmatpush1.msra.mxu0 0.0
      %783 = vmatprep.subr.mxu0 0.0
      %784 = vmatpush1.msra.mxu0 0.0
      %785 = vmatprep.subr.mxu0 0.0
      %786 = vmatpush1.msra.mxu0 0.0
      %787 = vmatprep.subr.mxu0 0.0
      %788 = vmatpush1.msra.mxu0 0.0
      %789 = vmatprep.subr.mxu0 0.0
      %790 = vmatpush1.msra.mxu0 0.0
      %791 = vmatprep.subr.mxu0 0.0
      %792 = vmatpush1.msra.mxu0 0.0
      %793 = vmatprep.subr.mxu0 0.0
      %794 = vmatpush1.msra.mxu0 0.0
      %795 = vmatprep.subr.mxu0 0.0
      %796 = vmatpush1.msra.mxu0 0.0
      %797 = vmatprep.subr.mxu0 0.0
      %798 = vmatpush1.msra.mxu0 0.0
      %799 = vmatprep.subr.mxu0 0.0
      %800 = vmatpush1.msra.mxu0 0.0
      %801 = vmatprep.subr.mxu0 0.0
      %802 = vmatpush1.msra.mxu0 0.0
      %803 = vmatprep.subr.mxu0 0.0
      %804 = vmatpush1.msra.mxu0 0.0
      %805 = vmatprep.subr.mxu0 0.0
      %806 = vmatpush1.msra.mxu0 0.0
      %807 = vmatprep.subr.mxu0 0.0
      %808 = vmatpush1.msra.mxu0 0.0
      %809 = vmatprep.subr.mxu0 0.0
      %810 = vmatpush1.msra.mxu0 0.0
      %811 = vmatprep.subr.mxu0 0.0
      %812 = vmatpush1.msra.mxu0 0.0
      %813 = vmatprep.subr.mxu0 0.0
      %814 = vmatpush1.msra.mxu0 0.0
      %815 = vmatprep.subr.mxu0 0.0
      %816 = vmatpush1.msra.mxu0 0.0
      %817 = vmatprep.subr.mxu0 0.0
      %818 = vmatpush1.msra.mxu0 0.0
      %819 = vmatprep.subr.mxu0 0.0
      %820 = vmatpush1.msra.mxu0 0.0
      %821 = vmatprep.mubr.f32.mxu0 0.0
      %822 = vmatmul.mubr.f32.gmra.mrb[0].mxu0 %v755
      %v823 = vpop.f32.mrb[0].mxu0
      %v824 = vadd.f32 0.0, %v823
      %v825 = vpop.f32.mrb[0].mxu0
      %826 = vdwg.mxu0
      %v827 = vadd.f32 %v753, %v824
      %v828 = vmul.f32 %v827, %v410
      %v829 = vtanh.pop %v828
      %v830 = vmul.f32 %v829, %v410
      %v831 = vadd.f32 %v830, %v411
      %833 = vrot.lane.b32.xlu0 %v751, 32
      %v834 = vpop.permute.xlu0 %833
      %v836 = vmul.f32 %v831, %v834
      %838 = vrot.lane.b32.xlu0 %v831, 64
      %v839 = vpop.permute.xlu0 %838
      %v841 = vmul.f32 %v831, %v839
      %843 = vrot.lane.b32.xlu0 %v841, 32
      %v844 = vpop.permute.xlu0 %843
      %v846 = vadd.f32 %v836, %v844
      %v847 = vtanh.pop %v846
      %849 = vrot.lane.b32.xlu0 %v847, 64
      %v850 = vpop.permute.xlu0 %849
      %v852 = vmul.f32 %v831, %v850
      %854 = vrot.lane.b32.xlu0 %v852, 32
      %v855 = vpop.permute.xlu0 %854
      %857 = vst.msk [vmem:[#allocation2] sm:$0xff] %vm299, %v855
      %859 = vrot.lane.b32.xlu0 %v846, 96
      %v860 = vpop.permute.xlu0 %859
      %862 = vst.msk [vmem:[#allocation3] sm:$0xff] %vm299, %v860
      %p863 = scmp.eq.s32.totalorder %s24, 1
      // Predicated region
      $region49: #{lstm_speedup_predictor.3} parent=43 // pred_check
        %p864 = pneg %p863
      $region50: #{lstm_speedup_predictor.3} parent=43 // pred_check_branch
        %866 = sbr.rel (%p864) target = $region52
      $region51: #{lstm_speedup_predictor.3} parent=43 // pred_region
        %v867 = vld [vmem:[#allocation2] sm:$0xff]
        %v868 = vld [vmem:[%s4] sm:$0xff]
        %v869 = vld [vmem:[%s4 + $0x8] sm:$0xff]
        %v870 = vld [vmem:[%s4 + $0x10] sm:$0xff]
        %v871 = vld [vmem:[%s4 + $0x18] sm:$0xff]
        %v872 = vld [vmem:[#allocation5] sm:$0x1]
        %v874 = vlaneseq
        %v875 = vshrl.u32 %v874, 7
        %v876 = vsub.s32 0, %v875
        %v877 = vrot.slane %v872, %v876
        %v880 = vsel %vm299, %v867, 0
        %882 = vmatprep.subr.mxu0 0.0
        %883 = vmatpush1.msra.mxu0 %v868
        %884 = vmatprep.subr.mxu0 0.0
        %885 = vmatpush1.msra.mxu0 %v869
        %886 = vmatprep.subr.mxu0 0.0
        %887 = vmatpush1.msra.mxu0 %v870
        %888 = vmatprep.subr.mxu0 0.0
        %889 = vmatpush1.msra.mxu0 %v871
        %890 = vmatprep.subr.mxu0 0.0
        %891 = vmatpush1.msra.mxu0 0.0
        %892 = vmatprep.subr.mxu0 0.0
        %893 = vmatpush1.msra.mxu0 0.0
        %894 = vmatprep.subr.mxu0 0.0
        %895 = vmatpush1.msra.mxu0 0.0
        %896 = vmatprep.subr.mxu0 0.0
        %897 = vmatpush1.msra.mxu0 0.0
        %898 = vmatprep.subr.mxu0 0.0
        %899 = vmatpush1.msra.mxu0 0.0
        %900 = vmatprep.subr.mxu0 0.0
        %901 = vmatpush1.msra.mxu0 0.0
        %902 = vmatprep.subr.mxu0 0.0
        %903 = vmatpush1.msra.mxu0 0.0
        %904 = vmatprep.subr.mxu0 0.0
        %905 = vmatpush1.msra.mxu0 0.0
        %906 = vmatprep.subr.mxu0 0.0
        %907 = vmatpush1.msra.mxu0 0.0
        %908 = vmatprep.subr.mxu0 0.0
        %909 = vmatpush1.msra.mxu0 0.0
        %910 = vmatprep.subr.mxu0 0.0
        %911 = vmatpush1.msra.mxu0 0.0
        %912 = vmatprep.subr.mxu0 0.0
        %913 = vmatpush1.msra.mxu0 0.0
        %914 = vmatprep.subr.mxu0 0.0
        %915 = vmatpush1.msra.mxu0 0.0
        %916 = vmatprep.subr.mxu0 0.0
        %917 = vmatpush1.msra.mxu0 0.0
        %918 = vmatprep.subr.mxu0 0.0
        %919 = vmatpush1.msra.mxu0 0.0
        %920 = vmatprep.subr.mxu0 0.0
        %921 = vmatpush1.msra.mxu0 0.0
        %922 = vmatprep.subr.mxu0 0.0
        %923 = vmatpush1.msra.mxu0 0.0
        %924 = vmatprep.subr.mxu0 0.0
        %925 = vmatpush1.msra.mxu0 0.0
        %926 = vmatprep.subr.mxu0 0.0
        %927 = vmatpush1.msra.mxu0 0.0
        %928 = vmatprep.subr.mxu0 0.0
        %929 = vmatpush1.msra.mxu0 0.0
        %930 = vmatprep.subr.mxu0 0.0
        %931 = vmatpush1.msra.mxu0 0.0
        %932 = vmatprep.subr.mxu0 0.0
        %933 = vmatpush1.msra.mxu0 0.0
        %934 = vmatprep.subr.mxu0 0.0
        %935 = vmatpush1.msra.mxu0 0.0
        %936 = vmatprep.subr.mxu0 0.0
        %937 = vmatpush1.msra.mxu0 0.0
        %938 = vmatprep.subr.mxu0 0.0
        %939 = vmatpush1.msra.mxu0 0.0
        %940 = vmatprep.subr.mxu0 0.0
        %941 = vmatpush1.msra.mxu0 0.0
        %942 = vmatprep.subr.mxu0 0.0
        %943 = vmatpush1.msra.mxu0 0.0
        %944 = vmatprep.subr.mxu0 0.0
        %945 = vmatpush1.msra.mxu0 0.0
        %946 = vmatprep.mubr.f32.mxu0 0.0
        %947 = vmatmul.mubr.f32.gmra.mrb[0].mxu0 %v880
        %v948 = vpop.f32.mrb[0].mxu0
        %v949 = vadd.f32 %v877, %v948
        %v950 = vpop.f32.mrb[0].mxu0
        %951 = vdwg.mxu0
        %vm952 = vcmask 7168
        %953 = vst.msk [vmem:[%s276] sm:$0xff] %vm952, %v949
      $region52: #{lstm_speedup_predictor.3} parent=43 // pred_fallthru
        _
      %p954 = scmp.lt.s32.totalorder %s23, 0
      %s955 = scalar_select %p954, %s23, 0
      %s956 = smul.addr %s955, 8
      %s957 = scalar_lea.vmem %s6, %s956
      // Predicated region
      $region53: #{lstm_speedup_predictor.3} parent=43 // pred_check
        %p958 = pneg %p182
      $region54: #{lstm_speedup_predictor.3} parent=43 // pred_check_branch
        %960 = sbr.rel (%p958) target = $region56
      $region55: #{lstm_speedup_predictor.3} parent=43 // pred_region
        _
      $region56: #{lstm_speedup_predictor.3} parent=43 // pred_fallthru
        _
      // Predicated region
      $region57: #{lstm_speedup_predictor.3} parent=43 // pred_check
        %p961 = pneg %p182
      $region58: #{lstm_speedup_predictor.3} parent=43 // pred_check_branch
        %963 = sbr.rel (%p961) target = $region60
      $region59: #{lstm_speedup_predictor.3} parent=43 // pred_region
        %p964 = scmp.lt.s32.totalorder %s23, 0
        %s965 = scalar_select %p964, %s23, 0
        %s966 = smul.addr %s965, 8
        %s967 = scalar_lea.vmem %s6, %s966
      $region60: #{lstm_speedup_predictor.3} parent=43 // pred_fallthru
        _
    $region44: #{lstm_speedup_predictor.3} parent=5 // pred_fallthru
      _
    %p968 = scmp.le.s32.totalorder 2, %s14
    // Predicated region
    $region61: #{lstm_speedup_predictor.3} parent=5 // pred_check
      %p969 = pneg %p968
    $region62: #{lstm_speedup_predictor.3} parent=5 // pred_check_branch
      %971 = sbr.rel (%p969) target = $region64
    $region63: #{lstm_speedup_predictor.3} parent=5 // pred_region
      %s972 = ssub.s32 %s14, 2
    $region64: #{lstm_speedup_predictor.3} parent=5 // pred_fallthru
      _
  $region6: #{lstm_speedup_predictor.3} parent=0 // loop_footer
    %s18 = sadd.s32 1, %s14
  $region7: #{lstm_speedup_predictor.3} parent=0 // loop_footer_branch
    %13 = sbr.rel target = $region3
  $region8: #{lstm_speedup_predictor.3} parent=0 // loop_exit
    _

</llo_original>
